<compile_context>
chip_gen: v7x
topology: tpu7x:2x2x1
jax: 0.10.0
libtpu: 0.0.40
codegen_flags: <defaults>
</compile_context>

<pallas_src>
import numpy as np
import jax
import jax.numpy as jnp
from jax.experimental import pallas as pl
from jax.experimental.pallas import tpu as pltpu


# --------------------------------------------------------------------------
# Fused forward: conv0 + conv1 + fc + LayerNorm + tanh in one pallas_call.
# --------------------------------------------------------------------------
def carla_encoder_forward(obs, params, feature_dim, batch_tile=4):
    batch_shape = obs.shape[:-3]
    C, H, W = obs.shape[-3:]
    OH0, OW0 = (H - 5) // 2 + 1, (W - 5) // 2 + 1
    OH1, OW1 = (OH0 - 3) // 2 + 1, (OW0 - 3) // 2 + 1
    S0, S1 = OH0 * OW0, OH1 * OW1

    KP = params["w0p"].shape[0]       # padded conv0 contraction (75 -> 128)
    FPAD = params["bfc_k"].shape[1]   # padded feature dim (50 -> 128)
    EMB = params["wfc_k"].shape[0]    # 128 * OH1 * OW1
    F = feature_dim

    x = obs.reshape((-1, C, H, W)).astype(jnp.float32)
    n = x.shape[0]
    bt = max(1, min(batch_tile, n))
    n_pad = -(-n // bt) * bt
    nb = n_pad // bt

    # ---- conv0 im2col on the raw obs (single cheap XLA gather, bf16 output).
    # Columns ordered (kh, kw, ic) to match w0p; /255 folded here; K padded to 128.
    xt = jnp.transpose(x, (0, 2, 3, 1))                       # (n, H, W, C)
    taps = []
    for i in range(5):
        for j in range(5):
            taps.append(xt[:, i:i + 2 * OH0 - 1:2, j:j + 2 * OW0 - 1:2, :])
    p0 = (jnp.concatenate(taps, axis=-1) * (1.0 / 255.0)).astype(jnp.bfloat16)
    p0 = jnp.pad(p0, ((0, 0), (0, 0), (0, 0), (0, KP - 25 * C)))
    p0 = p0.reshape(n, S0, KP)
    if n_pad != n:
        p0 = jnp.pad(p0, ((0, n_pad - n), (0, 0), (0, 0)))
    # rows within a batch tile ordered (spatial position, image) so conv1's
    # in-kernel im2col is plain contiguous row slices of the conv0 output.
    p0 = p0.reshape(nb, bt, S0, KP).transpose(0, 2, 1, 3).reshape(nb, S0 * bt, KP)

    def kernel(p0_ref, w0_ref, b0_ref, w1_ref, b1_ref,
               wfc_ref, bfc_ref, g_ref, beta_ref, o_ref):
        # conv0: one matmul for all S0 positions x bt images of this block.
        y0 = jnp.dot(p0_ref[...], w0_ref[...],
                     preferred_element_type=jnp.float32)
        y0 = jnp.maximum(y0 + b0_ref[...], 0.0)               # (S0*bt, 64) f32
        y0b = y0.astype(jnp.bfloat16)                         # stays in VMEM

        # conv1 (in-kernel im2col via static row slices) + channel-last flatten.
        feats = []
        for oh1 in range(OH1):
            for ow1 in range(OW1):
                taps1 = []
                for i1 in range(3):
                    for j1 in range(3):
                        s0 = (2 * oh1 + i1) * OW0 + (2 * ow1 + j1)
                        taps1.append(y0b[s0 * bt:(s0 + 1) * bt, :])
                p1 = jnp.concatenate(taps1, axis=-1)          # (bt, 576) bf16
                y1 = jnp.dot(p1, w1_ref[...],
                             preferred_element_type=jnp.float32)
                y1 = jnp.maximum(y1 + b1_ref[...], 0.0)       # (bt, 128) f32
                feats.append(y1.astype(jnp.bfloat16))
        embed = jnp.concatenate(feats, axis=-1)               # (bt, 128*S1)

        # fc into a lane-dense 128-wide (padded) feature dim.
        z = jnp.dot(embed, wfc_ref[...],
                    preferred_element_type=jnp.float32) + bfc_ref[...]

        # LayerNorm over the true F lanes (pad lanes of z are exactly zero).
        lane = jax.lax.broadcasted_iota(jnp.int32, z.shape, 1)
        mask = (lane < F).astype(jnp.float32)
        mu = jnp.sum(z * mask, axis=-1, keepdims=True) * (1.0 / F)
        cen = (z - mu) * mask
        var = jnp.sum(cen * cen, axis=-1, keepdims=True) * (1.0 / F)
        zn = cen * jax.lax.rsqrt(var + 1e-5)
        o_ref[...] = jnp.tanh(zn * g_ref[...] + beta_ref[...])

    flops = (2 * nb * (S0 * bt) * KP * 64
             + 2 * n_pad * S1 * (9 * 64) * 128
             + 2 * n_pad * EMB * FPAD)
    bytes_accessed = (p0.size * 2
                      + params["w0p"].size * 2 + params["w1r"].size * 2
                      + params["wfc_k"].size * 2
                      + (params["b0k"].size + params["b1k"].size
                         + params["bfc_k"].size + params["ln_g"].size
                         + params["ln_b"].size) * 4
                      + nb * bt * FPAD * 4)

    out = pl.pallas_call(
        kernel,
        out_shape=jax.ShapeDtypeStruct((nb, bt, FPAD), jnp.float32),
        grid=(nb,),
        in_specs=[
            pl.BlockSpec((None, S0 * bt, KP), lambda b: (b, 0, 0)),   # patches
            pl.BlockSpec(params["w0p"].shape, lambda b: (0, 0)),      # weights:
            pl.BlockSpec(params["b0k"].shape, lambda b: (0, 0)),      # constant
            pl.BlockSpec(params["w1r"].shape, lambda b: (0, 0)),      # blocks,
            pl.BlockSpec(params["b1k"].shape, lambda b: (0, 0)),      # stay
            pl.BlockSpec(params["wfc_k"].shape, lambda b: (0, 0)),    # resident
            pl.BlockSpec(params["bfc_k"].shape, lambda b: (0, 0)),
            pl.BlockSpec(params["ln_g"].shape, lambda b: (0, 0)),
            pl.BlockSpec(params["ln_b"].shape, lambda b: (0, 0)),
        ],
        out_specs=pl.BlockSpec((None, bt, FPAD), lambda b: (b, 0, 0)),
        compiler_params=pltpu.CompilerParams(
            dimension_semantics=("parallel",),
            vmem_limit_bytes=32 * 1024 * 1024),
        cost_estimate=pl.CostEstimate(flops=flops,
                                      transcendentals=n_pad * (FPAD + 1),
                                      bytes_accessed=bytes_accessed),
    )(p0, params["w0p"], params["b0k"], params["w1r"], params["b1k"],
      params["wfc_k"], params["bfc_k"], params["ln_g"], params["ln_b"])

    out = out.reshape(n_pad, FPAD)[:n, :F]
    return out.reshape(batch_shape + (F,))


# --------------------------------------------------------------------------
# Pure-JAX reference (same math & same bf16 matmul inputs) for the assert.
# --------------------------------------------------------------------------
def reference_forward(obs, ref_params, feature_dim):
    bs = obs.shape[:-3]
    bf = jnp.bfloat16
    x = obs.reshape((-1,) + obs.shape[-3:]).astype(jnp.float32) / 255.0
    dn = ("NCHW", "OIHW", "NCHW")
    y = jax.lax.conv_general_dilated(
        x.astype(bf), ref_params["w0_oihw"].astype(bf), (2, 2), "VALID",
        dimension_numbers=dn, preferred_element_type=jnp.float32)
    y = jnp.maximum(y + ref_params["b0"].reshape(1, -1, 1, 1), 0.0)
    y = jax.lax.conv_general_dilated(
        y.astype(bf), ref_params["w1_oihw"].astype(bf), (2, 2), "VALID",
        dimension_numbers=dn, preferred_element_type=jnp.float32)
    y = jnp.maximum(y + ref_params["b1"].reshape(1, -1, 1, 1), 0.0)
    embed = y.reshape(y.shape[0], -1).astype(bf)              # NCHW flatten
    z = jnp.dot(embed, ref_params["wfc_in"].astype(bf),
                preferred_element_type=jnp.float32) + ref_params["bfc"]
    mu = jnp.mean(z, axis=-1, keepdims=True)
    var = jnp.mean((z - mu) ** 2, axis=-1, keepdims=True)
    zn = (z - mu) * jax.lax.rsqrt(var + 1e-5)
    out = jnp.tanh(zn)                        # LN gamma=1, beta=0 (torch default)
    return out.reshape(bs + (feature_dim,))


# --------------------------------------------------------------------------
# Deterministic parameter construction (PyTorch-style init + kernel layouts).
# --------------------------------------------------------------------------
def make_params(key, in_ch, img_hw, feature_dim):
    H = W = img_hw
    OH0, OW0 = (H - 5) // 2 + 1, (W - 5) // 2 + 1
    OH1, OW1 = (OH0 - 3) // 2 + 1, (OW0 - 3) // 2 + 1
    S1 = OH1 * OW1
    embed = 128 * S1
    KP, FPAD = 128, 128
    k0, k1, k2, k3, k4, k5 = jax.random.split(key, 6)

    def uinit(k, shape, fan_in):
        bound = 1.0 / np.sqrt(fan_in)
        return jax.random.uniform(k, shape, jnp.float32, -bound, bound)

    w0_oihw = uinit(k0, (64, in_ch, 5, 5), in_ch * 25)
    b0 = uinit(k1, (64,), in_ch * 25)
    w1_oihw = uinit(k2, (128, 64, 3, 3), 64 * 9)
    b1 = uinit(k3, (128,), 64 * 9)
    wfc_t = uinit(k4, (feature_dim, embed), embed)            # torch (out, in)
    bfc = uinit(k5, (feature_dim,), embed)

    # conv weights in (kh, kw, ic) -> oc matmul form; conv0 K padded to 128.
    w0r = jnp.transpose(w0_oihw, (2, 3, 1, 0)).reshape(25 * in_ch, 64)
    w0p = jnp.zeros((KP, 64), jnp.float32).at[:25 * in_ch].set(w0r)
    w1r = jnp.transpose(w1_oihw, (2, 3, 1, 0)).reshape(9 * 64, 128)

    # fc: permute rows from torch's NCHW flatten (c, h, w) to the kernel's
    # channel-last flatten (h, w, c); pad output columns 50 -> 128 with zeros.
    wfc_in = wfc_t.T                                          # (embed, F), torch order
    wfc_perm = wfc_in.reshape(128, S1, feature_dim).transpose(1, 0, 2)
    wfc_perm = wfc_perm.reshape(embed, feature_dim)
    wfc_k = jnp.zeros((embed, FPAD), jnp.float32).at[:, :feature_dim].set(wfc_perm)
    bfc_k = jnp.zeros((1, FPAD), jnp.float32).at[0, :feature_dim].set(bfc)
    g_k = jnp.zeros((1, FPAD), jnp.float32).at[0, :feature_dim].set(1.0)
    beta_k = jnp.zeros((1, FPAD), jnp.float32)

    params = {
        "w0p": w0p.astype(jnp.bfloat16), "b0k": b0.reshape(1, 64),
        "w1r": w1r.astype(jnp.bfloat16), "b1k": b1.reshape(1, 128),
        "wfc_k": wfc_k.astype(jnp.bfloat16), "bfc_k": bfc_k,
        "ln_g": g_k, "ln_b": beta_k,
    }
    ref_params = {
        "w0_oihw": w0_oihw, "b0": b0, "w1_oihw": w1_oihw, "b1": b1,
        "wfc_in": wfc_in, "bfc": bfc,
    }
    return params, ref_params


if __name__ == "__main__":
    key = jax.random.PRNGKey(0)
    kp, kx = jax.random.split(key)

    in_ch, img_hw, feature_dim = 3, 16, 50
    params, ref_params = make_params(kp, in_ch, img_hw, feature_dim)

    # obs: (*batch_shape, C, H, W) in [0, 255], batch_shape = (2, 4)
    obs = jax.random.uniform(kx, (2, 4, in_ch, img_hw, img_hw),
                             jnp.float32, 0.0, 255.0)

    fwd = jax.jit(carla_encoder_forward,
                  static_argnames=("feature_dim", "batch_tile"))
    out = fwd(obs, params, feature_dim=feature_dim, batch_tile=4)
    out = jax.block_until_ready(out)

    ref = reference_forward(obs, ref_params, feature_dim)
    assert out.shape == (2, 4, feature_dim), out.shape
    np.testing.assert_allclose(np.asarray(out), np.asarray(ref),
                               atol=5e-3, rtol=5e-3)
    print("KERNEL_OK")
</pallas_src>

<mosaic_0001>
module attributes {stable_mosaic.version = 11 : i64} {
  func.func @kernel(%arg0: i32, %arg1: memref<1x144x128xbf16, #tpu.memory_space<vmem>>, %arg2: memref<128x64xbf16, #tpu.memory_space<vmem>>, %arg3: memref<1x64xf32, #tpu.memory_space<vmem>>, %arg4: memref<576x128xbf16, #tpu.memory_space<vmem>>, %arg5: memref<1x128xf32, #tpu.memory_space<vmem>>, %arg6: memref<512x128xbf16, #tpu.memory_space<vmem>>, %arg7: memref<1x128xf32, #tpu.memory_space<vmem>>, %arg8: memref<1x128xf32, #tpu.memory_space<vmem>>, %arg9: memref<1x128xf32, #tpu.memory_space<vmem>>, %arg10: memref<1x4x128xf32, #tpu.memory_space<vmem>>) attributes {dimension_semantics = [#tpu.dimension_semantics<parallel>], iteration_bounds = array<i64: 2>, scalar_prefetch = 0 : i64, scratch_operands = 0 : i64, tpu.core_type = #tpu.core_type<tc>, window_params = [{transform_indices = @transform_0, window_bounds = array<i64: 1, 144, 128>}, {pipeline_mode = #tpu.pipeline_mode<synchronous>, transform_indices = @transform_1, window_bounds = array<i64: 128, 64>}, {pipeline_mode = #tpu.pipeline_mode<synchronous>, transform_indices = @transform_2, window_bounds = array<i64: 1, 64>}, {pipeline_mode = #tpu.pipeline_mode<synchronous>, transform_indices = @transform_3, window_bounds = array<i64: 576, 128>}, {pipeline_mode = #tpu.pipeline_mode<synchronous>, transform_indices = @transform_4, window_bounds = array<i64: 1, 128>}, {pipeline_mode = #tpu.pipeline_mode<synchronous>, transform_indices = @transform_5, window_bounds = array<i64: 512, 128>}, {pipeline_mode = #tpu.pipeline_mode<synchronous>, transform_indices = @transform_6, window_bounds = array<i64: 1, 128>}, {pipeline_mode = #tpu.pipeline_mode<synchronous>, transform_indices = @transform_7, window_bounds = array<i64: 1, 128>}, {pipeline_mode = #tpu.pipeline_mode<synchronous>, transform_indices = @transform_8, window_bounds = array<i64: 1, 128>}, {transform_indices = @transform_9, window_bounds = array<i64: 1, 4, 128>}]} {
    %c0 = arith.constant 0 : index
    %c0_0 = arith.constant 0 : index
    %c0_1 = arith.constant 0 : index
    %0 = vector.load %arg1[%c0, %c0_0, %c0_1] : memref<1x144x128xbf16, #tpu.memory_space<vmem>>, vector<1x144x128xbf16>
    %1 = vector.shape_cast %0 : vector<1x144x128xbf16> to vector<144x128xbf16>
    %c0_2 = arith.constant 0 : index
    %c0_3 = arith.constant 0 : index
    %2 = vector.load %arg2[%c0_2, %c0_3] : memref<128x64xbf16, #tpu.memory_space<vmem>>, vector<128x64xbf16>
    %cst = arith.constant dense<0.000000e+00> : vector<144x64xf32>
    %3 = tpu.matmul %1, %2, %cst {dimension_numbers = #tpu.dot_dimension_numbers<[1], [0], [0], [1], [0, 0, 1, 1], [], []>} : vector<144x128xbf16>, vector<128x64xbf16>, vector<144x64xf32> -> vector<144x64xf32>
    %c0_4 = arith.constant 0 : index
    %c0_5 = arith.constant 0 : index
    %4 = vector.load %arg3[%c0_4, %c0_5] : memref<1x64xf32, #tpu.memory_space<vmem>>, vector<1x64xf32>
    %5 = vector.broadcast %4 : vector<1x64xf32> to vector<144x64xf32>
    %6 = arith.addf %3, %5 : vector<144x64xf32>
    %cst_6 = arith.constant 0.000000e+00 : f32
    %7 = vector.broadcast %cst_6 : f32 to vector<144x64xf32>
    %8 = arith.maximumf %6, %7 : vector<144x64xf32>
    %9 = arith.truncf %8 : vector<144x64xf32> to vector<144x64xbf16>
    %10 = vector.extract_strided_slice %9 {offsets = [0, 0], sizes = [4, 64], strides = [1, 1]} : vector<144x64xbf16> to vector<4x64xbf16>
    %11 = vector.extract_strided_slice %9 {offsets = [4, 0], sizes = [4, 64], strides = [1, 1]} : vector<144x64xbf16> to vector<4x64xbf16>
    %12 = vector.extract_strided_slice %9 {offsets = [8, 0], sizes = [4, 64], strides = [1, 1]} : vector<144x64xbf16> to vector<4x64xbf16>
    %13 = vector.extract_strided_slice %9 {offsets = [24, 0], sizes = [4, 64], strides = [1, 1]} : vector<144x64xbf16> to vector<4x64xbf16>
    %14 = vector.extract_strided_slice %9 {offsets = [28, 0], sizes = [4, 64], strides = [1, 1]} : vector<144x64xbf16> to vector<4x64xbf16>
    %15 = vector.extract_strided_slice %9 {offsets = [32, 0], sizes = [4, 64], strides = [1, 1]} : vector<144x64xbf16> to vector<4x64xbf16>
    %16 = vector.extract_strided_slice %9 {offsets = [48, 0], sizes = [4, 64], strides = [1, 1]} : vector<144x64xbf16> to vector<4x64xbf16>
    %17 = vector.extract_strided_slice %9 {offsets = [52, 0], sizes = [4, 64], strides = [1, 1]} : vector<144x64xbf16> to vector<4x64xbf16>
    %18 = vector.extract_strided_slice %9 {offsets = [56, 0], sizes = [4, 64], strides = [1, 1]} : vector<144x64xbf16> to vector<4x64xbf16>
    %19 = tpu.concatenate %10, %11, %12, %13, %14, %15, %16, %17, %18 in 1 : vector<4x64xbf16>, vector<4x64xbf16>, vector<4x64xbf16>, vector<4x64xbf16>, vector<4x64xbf16>, vector<4x64xbf16>, vector<4x64xbf16>, vector<4x64xbf16>, vector<4x64xbf16> -> vector<4x576xbf16>
    %c0_7 = arith.constant 0 : index
    %c0_8 = arith.constant 0 : index
    %20 = vector.load %arg4[%c0_7, %c0_8] : memref<576x128xbf16, #tpu.memory_space<vmem>>, vector<576x128xbf16>
    %cst_9 = arith.constant dense<0.000000e+00> : vector<4x128xf32>
    %21 = tpu.matmul %19, %20, %cst_9 {dimension_numbers = #tpu.dot_dimension_numbers<[1], [0], [0], [1], [0, 0, 1, 1], [], []>} : vector<4x576xbf16>, vector<576x128xbf16>, vector<4x128xf32> -> vector<4x128xf32>
    %c0_10 = arith.constant 0 : index
    %c0_11 = arith.constant 0 : index
    %22 = vector.load %arg5[%c0_10, %c0_11] : memref<1x128xf32, #tpu.memory_space<vmem>>, vector<1x128xf32>
    %23 = vector.broadcast %22 : vector<1x128xf32> to vector<4x128xf32>
    %24 = arith.addf %21, %23 : vector<4x128xf32>
    %cst_12 = arith.constant 0.000000e+00 : f32
    %25 = vector.broadcast %cst_12 : f32 to vector<4x128xf32>
    %26 = arith.maximumf %24, %25 : vector<4x128xf32>
    %27 = arith.truncf %26 : vector<4x128xf32> to vector<4x128xbf16>
    %28 = vector.extract_strided_slice %9 {offsets = [8, 0], sizes = [4, 64], strides = [1, 1]} : vector<144x64xbf16> to vector<4x64xbf16>
    %29 = vector.extract_strided_slice %9 {offsets = [12, 0], sizes = [4, 64], strides = [1, 1]} : vector<144x64xbf16> to vector<4x64xbf16>
    %30 = vector.extract_strided_slice %9 {offsets = [16, 0], sizes = [4, 64], strides = [1, 1]} : vector<144x64xbf16> to vector<4x64xbf16>
    %31 = vector.extract_strided_slice %9 {offsets = [32, 0], sizes = [4, 64], strides = [1, 1]} : vector<144x64xbf16> to vector<4x64xbf16>
    %32 = vector.extract_strided_slice %9 {offsets = [36, 0], sizes = [4, 64], strides = [1, 1]} : vector<144x64xbf16> to vector<4x64xbf16>
    %33 = vector.extract_strided_slice %9 {offsets = [40, 0], sizes = [4, 64], strides = [1, 1]} : vector<144x64xbf16> to vector<4x64xbf16>
    %34 = vector.extract_strided_slice %9 {offsets = [56, 0], sizes = [4, 64], strides = [1, 1]} : vector<144x64xbf16> to vector<4x64xbf16>
    %35 = vector.extract_strided_slice %9 {offsets = [60, 0], sizes = [4, 64], strides = [1, 1]} : vector<144x64xbf16> to vector<4x64xbf16>
    %36 = vector.extract_strided_slice %9 {offsets = [64, 0], sizes = [4, 64], strides = [1, 1]} : vector<144x64xbf16> to vector<4x64xbf16>
    %37 = tpu.concatenate %28, %29, %30, %31, %32, %33, %34, %35, %36 in 1 : vector<4x64xbf16>, vector<4x64xbf16>, vector<4x64xbf16>, vector<4x64xbf16>, vector<4x64xbf16>, vector<4x64xbf16>, vector<4x64xbf16>, vector<4x64xbf16>, vector<4x64xbf16> -> vector<4x576xbf16>
    %c0_13 = arith.constant 0 : index
    %c0_14 = arith.constant 0 : index
    %38 = vector.load %arg4[%c0_13, %c0_14] : memref<576x128xbf16, #tpu.memory_space<vmem>>, vector<576x128xbf16>
    %cst_15 = arith.constant dense<0.000000e+00> : vector<4x128xf32>
    %39 = tpu.matmul %37, %38, %cst_15 {dimension_numbers = #tpu.dot_dimension_numbers<[1], [0], [0], [1], [0, 0, 1, 1], [], []>} : vector<4x576xbf16>, vector<576x128xbf16>, vector<4x128xf32> -> vector<4x128xf32>
    %c0_16 = arith.constant 0 : index
    %c0_17 = arith.constant 0 : index
    %40 = vector.load %arg5[%c0_16, %c0_17] : memref<1x128xf32, #tpu.memory_space<vmem>>, vector<1x128xf32>
    %41 = vector.broadcast %40 : vector<1x128xf32> to vector<4x128xf32>
    %42 = arith.addf %39, %41 : vector<4x128xf32>
    %cst_18 = arith.constant 0.000000e+00 : f32
    %43 = vector.broadcast %cst_18 : f32 to vector<4x128xf32>
    %44 = arith.maximumf %42, %43 : vector<4x128xf32>
    %45 = arith.truncf %44 : vector<4x128xf32> to vector<4x128xbf16>
    %46 = vector.extract_strided_slice %9 {offsets = [48, 0], sizes = [4, 64], strides = [1, 1]} : vector<144x64xbf16> to vector<4x64xbf16>
    %47 = vector.extract_strided_slice %9 {offsets = [52, 0], sizes = [4, 64], strides = [1, 1]} : vector<144x64xbf16> to vector<4x64xbf16>
    %48 = vector.extract_strided_slice %9 {offsets = [56, 0], sizes = [4, 64], strides = [1, 1]} : vector<144x64xbf16> to vector<4x64xbf16>
    %49 = vector.extract_strided_slice %9 {offsets = [72, 0], sizes = [4, 64], strides = [1, 1]} : vector<144x64xbf16> to vector<4x64xbf16>
    %50 = vector.extract_strided_slice %9 {offsets = [76, 0], sizes = [4, 64], strides = [1, 1]} : vector<144x64xbf16> to vector<4x64xbf16>
    %51 = vector.extract_strided_slice %9 {offsets = [80, 0], sizes = [4, 64], strides = [1, 1]} : vector<144x64xbf16> to vector<4x64xbf16>
    %52 = vector.extract_strided_slice %9 {offsets = [96, 0], sizes = [4, 64], strides = [1, 1]} : vector<144x64xbf16> to vector<4x64xbf16>
    %53 = vector.extract_strided_slice %9 {offsets = [100, 0], sizes = [4, 64], strides = [1, 1]} : vector<144x64xbf16> to vector<4x64xbf16>
    %54 = vector.extract_strided_slice %9 {offsets = [104, 0], sizes = [4, 64], strides = [1, 1]} : vector<144x64xbf16> to vector<4x64xbf16>
    %55 = tpu.concatenate %46, %47, %48, %49, %50, %51, %52, %53, %54 in 1 : vector<4x64xbf16>, vector<4x64xbf16>, vector<4x64xbf16>, vector<4x64xbf16>, vector<4x64xbf16>, vector<4x64xbf16>, vector<4x64xbf16>, vector<4x64xbf16>, vector<4x64xbf16> -> vector<4x576xbf16>
    %c0_19 = arith.constant 0 : index
    %c0_20 = arith.constant 0 : index
    %56 = vector.load %arg4[%c0_19, %c0_20] : memref<576x128xbf16, #tpu.memory_space<vmem>>, vector<576x128xbf16>
    %cst_21 = arith.constant dense<0.000000e+00> : vector<4x128xf32>
    %57 = tpu.matmul %55, %56, %cst_21 {dimension_numbers = #tpu.dot_dimension_numbers<[1], [0], [0], [1], [0, 0, 1, 1], [], []>} : vector<4x576xbf16>, vector<576x128xbf16>, vector<4x128xf32> -> vector<4x128xf32>
    %c0_22 = arith.constant 0 : index
    %c0_23 = arith.constant 0 : index
    %58 = vector.load %arg5[%c0_22, %c0_23] : memref<1x128xf32, #tpu.memory_space<vmem>>, vector<1x128xf32>
    %59 = vector.broadcast %58 : vector<1x128xf32> to vector<4x128xf32>
    %60 = arith.addf %57, %59 : vector<4x128xf32>
    %cst_24 = arith.constant 0.000000e+00 : f32
    %61 = vector.broadcast %cst_24 : f32 to vector<4x128xf32>
    %62 = arith.maximumf %60, %61 : vector<4x128xf32>
    %63 = arith.truncf %62 : vector<4x128xf32> to vector<4x128xbf16>
    %64 = vector.extract_strided_slice %9 {offsets = [56, 0], sizes = [4, 64], strides = [1, 1]} : vector<144x64xbf16> to vector<4x64xbf16>
    %65 = vector.extract_strided_slice %9 {offsets = [60, 0], sizes = [4, 64], strides = [1, 1]} : vector<144x64xbf16> to vector<4x64xbf16>
    %66 = vector.extract_strided_slice %9 {offsets = [64, 0], sizes = [4, 64], strides = [1, 1]} : vector<144x64xbf16> to vector<4x64xbf16>
    %67 = vector.extract_strided_slice %9 {offsets = [80, 0], sizes = [4, 64], strides = [1, 1]} : vector<144x64xbf16> to vector<4x64xbf16>
    %68 = vector.extract_strided_slice %9 {offsets = [84, 0], sizes = [4, 64], strides = [1, 1]} : vector<144x64xbf16> to vector<4x64xbf16>
    %69 = vector.extract_strided_slice %9 {offsets = [88, 0], sizes = [4, 64], strides = [1, 1]} : vector<144x64xbf16> to vector<4x64xbf16>
    %70 = vector.extract_strided_slice %9 {offsets = [104, 0], sizes = [4, 64], strides = [1, 1]} : vector<144x64xbf16> to vector<4x64xbf16>
    %71 = vector.extract_strided_slice %9 {offsets = [108, 0], sizes = [4, 64], strides = [1, 1]} : vector<144x64xbf16> to vector<4x64xbf16>
    %72 = vector.extract_strided_slice %9 {offsets = [112, 0], sizes = [4, 64], strides = [1, 1]} : vector<144x64xbf16> to vector<4x64xbf16>
    %73 = tpu.concatenate %64, %65, %66, %67, %68, %69, %70, %71, %72 in 1 : vector<4x64xbf16>, vector<4x64xbf16>, vector<4x64xbf16>, vector<4x64xbf16>, vector<4x64xbf16>, vector<4x64xbf16>, vector<4x64xbf16>, vector<4x64xbf16>, vector<4x64xbf16> -> vector<4x576xbf16>
    %c0_25 = arith.constant 0 : index
    %c0_26 = arith.constant 0 : index
    %74 = vector.load %arg4[%c0_25, %c0_26] : memref<576x128xbf16, #tpu.memory_space<vmem>>, vector<576x128xbf16>
    %cst_27 = arith.constant dense<0.000000e+00> : vector<4x128xf32>
    %75 = tpu.matmul %73, %74, %cst_27 {dimension_numbers = #tpu.dot_dimension_numbers<[1], [0], [0], [1], [0, 0, 1, 1], [], []>} : vector<4x576xbf16>, vector<576x128xbf16>, vector<4x128xf32> -> vector<4x128xf32>
    %c0_28 = arith.constant 0 : index
    %c0_29 = arith.constant 0 : index
    %76 = vector.load %arg5[%c0_28, %c0_29] : memref<1x128xf32, #tpu.memory_space<vmem>>, vector<1x128xf32>
    %77 = vector.broadcast %76 : vector<1x128xf32> to vector<4x128xf32>
    %78 = arith.addf %75, %77 : vector<4x128xf32>
    %cst_30 = arith.constant 0.000000e+00 : f32
    %79 = vector.broadcast %cst_30 : f32 to vector<4x128xf32>
    %80 = arith.maximumf %78, %79 : vector<4x128xf32>
    %81 = arith.truncf %80 : vector<4x128xf32> to vector<4x128xbf16>
    %82 = tpu.concatenate %27, %45, %63, %81 in 1 : vector<4x128xbf16>, vector<4x128xbf16>, vector<4x128xbf16>, vector<4x128xbf16> -> vector<4x512xbf16>
    %c0_31 = arith.constant 0 : index
    %c0_32 = arith.constant 0 : index
    %83 = vector.load %arg6[%c0_31, %c0_32] : memref<512x128xbf16, #tpu.memory_space<vmem>>, vector<512x128xbf16>
    %cst_33 = arith.constant dense<0.000000e+00> : vector<4x128xf32>
    %84 = tpu.matmul %82, %83, %cst_33 {dimension_numbers = #tpu.dot_dimension_numbers<[1], [0], [0], [1], [0, 0, 1, 1], [], []>} : vector<4x512xbf16>, vector<512x128xbf16>, vector<4x128xf32> -> vector<4x128xf32>
    %c0_34 = arith.constant 0 : index
    %c0_35 = arith.constant 0 : index
    %85 = vector.load %arg7[%c0_34, %c0_35] : memref<1x128xf32, #tpu.memory_space<vmem>>, vector<1x128xf32>
    %86 = vector.broadcast %85 : vector<1x128xf32> to vector<4x128xf32>
    %87 = arith.addf %84, %86 : vector<4x128xf32>
    %88 = tpu.iota {dimensions = array<i32: 1>} : vector<4x128xi32>
    %c50_i32 = arith.constant 50 : i32
    %89 = vector.broadcast %c50_i32 : i32 to vector<4x128xi32>
    %90 = arith.cmpi slt, %88, %89 : vector<4x128xi32>
    %91 = arith.extui %90 : vector<4x128xi1> to vector<4x128xi32>
    %92 = arith.sitofp %91 : vector<4x128xi32> to vector<4x128xf32>
    %93 = arith.mulf %87, %92 : vector<4x128xf32>
    %cst_36 = arith.constant dense<0.000000e+00> : vector<4xf32>
    %94 = vector.multi_reduction <add>, %93, %cst_36 [1] : vector<4x128xf32> to vector<4xf32>
    %95 = vector.shape_cast %94 : vector<4xf32> to vector<4x1xf32>
    %cst_37 = arith.constant 2.000000e-02 : f32
    %96 = vector.broadcast %cst_37 : f32 to vector<4x1xf32>
    %97 = arith.mulf %95, %96 : vector<4x1xf32>
    %98 = vector.broadcast %97 : vector<4x1xf32> to vector<4x128xf32>
    %99 = arith.subf %87, %98 : vector<4x128xf32>
    %100 = arith.mulf %99, %92 : vector<4x128xf32>
    %101 = arith.mulf %100, %100 : vector<4x128xf32>
    %cst_38 = arith.constant dense<0.000000e+00> : vector<4xf32>
    %102 = vector.multi_reduction <add>, %101, %cst_38 [1] : vector<4x128xf32> to vector<4xf32>
    %103 = vector.shape_cast %102 : vector<4xf32> to vector<4x1xf32>
    %cst_39 = arith.constant 2.000000e-02 : f32
    %104 = vector.broadcast %cst_39 : f32 to vector<4x1xf32>
    %105 = arith.mulf %103, %104 : vector<4x1xf32>
    %cst_40 = arith.constant 9.99999974E-6 : f32
    %106 = vector.broadcast %cst_40 : f32 to vector<4x1xf32>
    %107 = arith.addf %105, %106 : vector<4x1xf32>
    %108 = math.rsqrt %107 : vector<4x1xf32>
    %109 = vector.broadcast %108 : vector<4x1xf32> to vector<4x128xf32>
    %110 = arith.mulf %100, %109 : vector<4x128xf32>
    %c0_41 = arith.constant 0 : index
    %c0_42 = arith.constant 0 : index
    %111 = vector.load %arg8[%c0_41, %c0_42] : memref<1x128xf32, #tpu.memory_space<vmem>>, vector<1x128xf32>
    %112 = vector.broadcast %111 : vector<1x128xf32> to vector<4x128xf32>
    %113 = arith.mulf %110, %112 : vector<4x128xf32>
    %c0_43 = arith.constant 0 : index
    %c0_44 = arith.constant 0 : index
    %114 = vector.load %arg9[%c0_43, %c0_44] : memref<1x128xf32, #tpu.memory_space<vmem>>, vector<1x128xf32>
    %115 = vector.broadcast %114 : vector<1x128xf32> to vector<4x128xf32>
    %116 = arith.addf %113, %115 : vector<4x128xf32>
    %117 = math.tanh %116 : vector<4x128xf32>
    %c0_45 = arith.constant 0 : index
    %c0_46 = arith.constant 0 : index
    %c0_47 = arith.constant 0 : index
    %118 = vector.load %arg10[%c0_45, %c0_46, %c0_47] : memref<1x4x128xf32, #tpu.memory_space<vmem>>, vector<1x4x128xf32>
    %119 = vector.shape_cast %118 : vector<1x4x128xf32> to vector<4x128xf32>
    %120 = vector.shape_cast %117 : vector<4x128xf32> to vector<1x4x128xf32>
    tpu.vector_store %arg10[%c0_45, %c0_46, %c0_47], %120 {strides = array<i32>} : memref<1x4x128xf32, #tpu.memory_space<vmem>>, vector<1x4x128xf32>,
    return
  }
  func.func @transform_0(%arg0: i32) -> (i32, i32, i32) {
    %c0_i32 = arith.constant 0 : i32
    %c0_i32_0 = arith.constant 0 : i32
    %c0_i32_1 = arith.constant 0 : i32
    return %arg0, %c0_i32, %c0_i32_0 : i32, i32, i32
  }
  func.func @transform_1(%arg0: i32) -> (i32, i32) {
    %c0_i32 = arith.constant 0 : i32
    %c0_i32_0 = arith.constant 0 : i32
    %c0_i32_1 = arith.constant 0 : i32
    return %c0_i32, %c0_i32_0 : i32, i32
  }
  func.func @transform_2(%arg0: i32) -> (i32, i32) {
    %c0_i32 = arith.constant 0 : i32
    %c0_i32_0 = arith.constant 0 : i32
    %c0_i32_1 = arith.constant 0 : i32
    return %c0_i32, %c0_i32_0 : i32, i32
  }
  func.func @transform_3(%arg0: i32) -> (i32, i32) {
    %c0_i32 = arith.constant 0 : i32
    %c0_i32_0 = arith.constant 0 : i32
    %c0_i32_1 = arith.constant 0 : i32
    return %c0_i32, %c0_i32_0 : i32, i32
  }
  func.func @transform_4(%arg0: i32) -> (i32, i32) {
    %c0_i32 = arith.constant 0 : i32
    %c0_i32_0 = arith.constant 0 : i32
    %c0_i32_1 = arith.constant 0 : i32
    return %c0_i32, %c0_i32_0 : i32, i32
  }
  func.func @transform_5(%arg0: i32) -> (i32, i32) {
    %c0_i32 = arith.constant 0 : i32
    %c0_i32_0 = arith.constant 0 : i32
    %c0_i32_1 = arith.constant 0 : i32
    return %c0_i32, %c0_i32_0 : i32, i32
  }
  func.func @transform_6(%arg0: i32) -> (i32, i32) {
    %c0_i32 = arith.constant 0 : i32
    %c0_i32_0 = arith.constant 0 : i32
    %c0_i32_1 = arith.constant 0 : i32
    return %c0_i32, %c0_i32_0 : i32, i32
  }
  func.func @transform_7(%arg0: i32) -> (i32, i32) {
    %c0_i32 = arith.constant 0 : i32
    %c0_i32_0 = arith.constant 0 : i32
    %c0_i32_1 = arith.constant 0 : i32
    return %c0_i32, %c0_i32_0 : i32, i32
  }
  func.func @transform_8(%arg0: i32) -> (i32, i32) {
    %c0_i32 = arith.constant 0 : i32
    %c0_i32_0 = arith.constant 0 : i32
    %c0_i32_1 = arith.constant 0 : i32
    return %c0_i32, %c0_i32_0 : i32, i32
  }
  func.func @transform_9(%arg0: i32) -> (i32, i32, i32) {
    %c0_i32 = arith.constant 0 : i32
    %c0_i32_0 = arith.constant 0 : i32
    %c0_i32_1 = arith.constant 0 : i32
    return %arg0, %c0_i32, %c0_i32_0 : i32, i32, i32
  }
}

</mosaic_0001>

<llo_original>
// kernel: carla_encoder_forward.1
$region0: #{carla_encoder_forward.1}
  #allocation0 [shape = 'u32[]', space=smem, size = 0x4, offset = 0x4, fixed_abs, tag = 'smem constant byte address 0x4 - core index']
  #allocation1 [shape = 'u32[144,128]{1,0:T(1,128)}', space=vmem, size = 0x12000, scoped, tag = 'internal scratch']
  %s0 = inlined_call_operand.vmem [shape: bf16[2,144,128], index: 0, kind: input, shape index: {}]
  %s1 = inlined_call_operand.vmem [shape: bf16[128,64], index: 1, kind: input, shape index: {}]
  %s2 = inlined_call_operand.vmem [shape: f32[1,64], index: 2, kind: input, shape index: {}]
  %s3 = inlined_call_operand.vmem [shape: bf16[576,128], index: 3, kind: input, shape index: {}]
  %s4 = inlined_call_operand.vmem [shape: f32[1,128], index: 4, kind: input, shape index: {}]
  %s5 = inlined_call_operand.vmem [shape: bf16[512,128], index: 5, kind: input, shape index: {}]
  %s6 = inlined_call_operand.vmem [shape: f32[1,128], index: 6, kind: input, shape index: {}]
  %s7 = inlined_call_operand.vmem [shape: f32[1,128], index: 7, kind: input, shape index: {}]
  %s8 = inlined_call_operand.vmem [shape: f32[1,128], index: 8, kind: input, shape index: {}]
  %s9 = inlined_call_operand.hbm [shape: f32[2,4,128], index: 9, kind: output, shape index: {}]
  %s10 = sld [smem:[#allocation0]]
  $region69: #{carla_encoder_forward.1} parent=0
    _
  %s12 = ssub.s32 1, %s10
  %s13 = scalar_select 0, %s12, %s10
  $region1: #{carla_encoder_forward.1} parent=0
    #allocation2 [shape = 'u8[4096]{0}', space=vmem, size = 0x1000, scoped, tag = 'output window, operand 0']
    #allocation3 [shape = 's32[2]{0}', space=sflag, size = 0x8, scoped, tag = 'scoped memory for carla_encoder_forward.1']
    %14 = vsyncpa [#allocation3], 0
    %s15 = scalar_lea.sflag [#allocation3], 1
    %16 = vsyncpa %s15, 0
    loop: start=0, step=1, limit=4
    $region2: #{carla_encoder_forward.1} parent=1 // loop_pre_header
      _
    $region3: #{carla_encoder_forward.1} parent=1 // loop_header
      %s18 = sphi 0, %s22
      %p19 = scmp.ge.s32.totalorder %s18, 4
      %s28 = sphi 0, %s30
      %s31 = sphi 0, %s28
      %s32 = sphi 0, %s31
      %s48 = sphi 0, %s32
      %s52 = sphi 0, %s52
      %s54 = sphi 0, %s52
      %s55 = sphi 0, %s54
      %s69 = sphi 0, %s55
      %s73 = sphi 0, %s73
      %s75 = sphi 0, %s73
      %s76 = sphi 0, %s75
      %s90 = sphi 0, %s76
      %s94 = sphi 0, %s94
      %s96 = sphi 0, %s94
      %s97 = sphi 0, %s96
      %s111 = sphi 0, %s97
      %s115 = sphi 0, %s115
      %s117 = sphi 0, %s115
      %s118 = sphi 0, %s117
      %s132 = sphi 0, %s118
      %s136 = sphi 0, %s136
      %s138 = sphi 0, %s136
      %s139 = sphi 0, %s138
      %s153 = sphi 0, %s139
      %s157 = sphi 0, %s157
      %s159 = sphi 0, %s157
      %s160 = sphi 0, %s159
      %s174 = sphi 0, %s160
      %s178 = sphi 0, %s178
      %s180 = sphi 0, %s178
      %s181 = sphi 0, %s180
      %s195 = sphi 0, %s181
      %s199 = sphi 0, %s199
      %s201 = sphi 0, %s199
      %s202 = sphi 0, %s201
      %s216 = sphi 0, %s202
      %s222 = sphi 0, %s224
      %s225 = sphi 0, %s222
      %s226 = sphi 0, %s225
      %s242 = sphi 0, %s226
    $region4: #{carla_encoder_forward.1} parent=1 // loop_header_branch
      %21 = sbr.rel (%p19) target = $region8
    $region5: #{carla_encoder_forward.1} parent=1 // loop_body
      %s23 = ssub.s32 %s18, 1
      %s24 = ssub.s32 %s18, 2
      %s25 = sadd.s32 %s18, 1
      %s26 = ssub.s32 %s18, %s25
      %p27 = scmp.eq.s32.totalorder %s26, 0
      %s29 = sadd.s32 %s28, 1
      %s30 = scalar_select %p27, %s28, %s29
      %p33 = pneg %p27
      %p34 = scmp.eq.s32.totalorder %s18, 1
      %p35 = por %p33, %p34
      %p36 = scmp.ne.s32.totalorder %s28, %s31
      %p37 = scmp.eq.s32.totalorder %s18, 0
      %p38 = por %p36, %p37
      %p39 = scmp.ne.s32.totalorder %s28, %s31
      %p40 = scmp.eq.s32.totalorder %s23, 1
      %p41 = por %p39, %p40
      %p42 = scmp.ne.s32.totalorder %s31, %s32
      %p43 = scmp.eq.s32.totalorder %s23, 0
      %p44 = por %p42, %p43
      %p45 = scmp.ne.s32.totalorder %s31, %s32
      %p46 = scmp.eq.s32.totalorder %s24, 1
      %p47 = por %p45, %p46
      %p49 = scmp.ne.s32.totalorder %s32, %s48
      %p50 = scmp.eq.s32.totalorder %s24, 0
      %p51 = por %p49, %p50
      %s53 = sadd.s32 %s52, 1
      %p56 = scmp.eq.s32.totalorder %s18, 1
      %p57 = scmp.ne.s32.totalorder %s52, %s54
      %p58 = scmp.eq.s32.totalorder %s18, 0
      %p59 = por %p57, %p58
      %p60 = scmp.ne.s32.totalorder %s52, %s54
      %p61 = scmp.eq.s32.totalorder %s23, 1
      %p62 = por %p60, %p61
      %p63 = scmp.ne.s32.totalorder %s54, %s55
      %p64 = scmp.eq.s32.totalorder %s23, 0
      %p65 = por %p63, %p64
      %p66 = scmp.ne.s32.totalorder %s54, %s55
      %p67 = scmp.eq.s32.totalorder %s24, 1
      %p68 = por %p66, %p67
      %p70 = scmp.ne.s32.totalorder %s55, %s69
      %p71 = scmp.eq.s32.totalorder %s24, 0
      %p72 = por %p70, %p71
      %s74 = sadd.s32 %s73, 1
      %p77 = scmp.eq.s32.totalorder %s18, 1
      %p78 = scmp.ne.s32.totalorder %s73, %s75
      %p79 = scmp.eq.s32.totalorder %s18, 0
      %p80 = por %p78, %p79
      %p81 = scmp.ne.s32.totalorder %s73, %s75
      %p82 = scmp.eq.s32.totalorder %s23, 1
      %p83 = por %p81, %p82
      %p84 = scmp.ne.s32.totalorder %s75, %s76
      %p85 = scmp.eq.s32.totalorder %s23, 0
      %p86 = por %p84, %p85
      %p87 = scmp.ne.s32.totalorder %s75, %s76
      %p88 = scmp.eq.s32.totalorder %s24, 1
      %p89 = por %p87, %p88
      %p91 = scmp.ne.s32.totalorder %s76, %s90
      %p92 = scmp.eq.s32.totalorder %s24, 0
      %p93 = por %p91, %p92
      %s95 = sadd.s32 %s94, 1
      %p98 = scmp.eq.s32.totalorder %s18, 1
      %p99 = scmp.ne.s32.totalorder %s94, %s96
      %p100 = scmp.eq.s32.totalorder %s18, 0
      %p101 = por %p99, %p100
      %p102 = scmp.ne.s32.totalorder %s94, %s96
      %p103 = scmp.eq.s32.totalorder %s23, 1
      %p104 = por %p102, %p103
      %p105 = scmp.ne.s32.totalorder %s96, %s97
      %p106 = scmp.eq.s32.totalorder %s23, 0
      %p107 = por %p105, %p106
      %p108 = scmp.ne.s32.totalorder %s96, %s97
      %p109 = scmp.eq.s32.totalorder %s24, 1
      %p110 = por %p108, %p109
      %p112 = scmp.ne.s32.totalorder %s97, %s111
      %p113 = scmp.eq.s32.totalorder %s24, 0
      %p114 = por %p112, %p113
      %s116 = sadd.s32 %s115, 1
      %p119 = scmp.eq.s32.totalorder %s18, 1
      %p120 = scmp.ne.s32.totalorder %s115, %s117
      %p121 = scmp.eq.s32.totalorder %s18, 0
      %p122 = por %p120, %p121
      %p123 = scmp.ne.s32.totalorder %s115, %s117
      %p124 = scmp.eq.s32.totalorder %s23, 1
      %p125 = por %p123, %p124
      %p126 = scmp.ne.s32.totalorder %s117, %s118
      %p127 = scmp.eq.s32.totalorder %s23, 0
      %p128 = por %p126, %p127
      %p129 = scmp.ne.s32.totalorder %s117, %s118
      %p130 = scmp.eq.s32.totalorder %s24, 1
      %p131 = por %p129, %p130
      %p133 = scmp.ne.s32.totalorder %s118, %s132
      %p134 = scmp.eq.s32.totalorder %s24, 0
      %p135 = por %p133, %p134
      %s137 = sadd.s32 %s136, 1
      %p140 = scmp.eq.s32.totalorder %s18, 1
      %p141 = scmp.ne.s32.totalorder %s136, %s138
      %p142 = scmp.eq.s32.totalorder %s18, 0
      %p143 = por %p141, %p142
      %p144 = scmp.ne.s32.totalorder %s136, %s138
      %p145 = scmp.eq.s32.totalorder %s23, 1
      %p146 = por %p144, %p145
      %p147 = scmp.ne.s32.totalorder %s138, %s139
      %p148 = scmp.eq.s32.totalorder %s23, 0
      %p149 = por %p147, %p148
      %p150 = scmp.ne.s32.totalorder %s138, %s139
      %p151 = scmp.eq.s32.totalorder %s24, 1
      %p152 = por %p150, %p151
      %p154 = scmp.ne.s32.totalorder %s139, %s153
      %p155 = scmp.eq.s32.totalorder %s24, 0
      %p156 = por %p154, %p155
      %s158 = sadd.s32 %s157, 1
      %p161 = scmp.eq.s32.totalorder %s18, 1
      %p162 = scmp.ne.s32.totalorder %s157, %s159
      %p163 = scmp.eq.s32.totalorder %s18, 0
      %p164 = por %p162, %p163
      %p165 = scmp.ne.s32.totalorder %s157, %s159
      %p166 = scmp.eq.s32.totalorder %s23, 1
      %p167 = por %p165, %p166
      %p168 = scmp.ne.s32.totalorder %s159, %s160
      %p169 = scmp.eq.s32.totalorder %s23, 0
      %p170 = por %p168, %p169
      %p171 = scmp.ne.s32.totalorder %s159, %s160
      %p172 = scmp.eq.s32.totalorder %s24, 1
      %p173 = por %p171, %p172
      %p175 = scmp.ne.s32.totalorder %s160, %s174
      %p176 = scmp.eq.s32.totalorder %s24, 0
      %p177 = por %p175, %p176
      %s179 = sadd.s32 %s178, 1
      %p182 = scmp.eq.s32.totalorder %s18, 1
      %p183 = scmp.ne.s32.totalorder %s178, %s180
      %p184 = scmp.eq.s32.totalorder %s18, 0
      %p185 = por %p183, %p184
      %p186 = scmp.ne.s32.totalorder %s178, %s180
      %p187 = scmp.eq.s32.totalorder %s23, 1
      %p188 = por %p186, %p187
      %p189 = scmp.ne.s32.totalorder %s180, %s181
      %p190 = scmp.eq.s32.totalorder %s23, 0
      %p191 = por %p189, %p190
      %p192 = scmp.ne.s32.totalorder %s180, %s181
      %p193 = scmp.eq.s32.totalorder %s24, 1
      %p194 = por %p192, %p193
      %p196 = scmp.ne.s32.totalorder %s181, %s195
      %p197 = scmp.eq.s32.totalorder %s24, 0
      %p198 = por %p196, %p197
      %s200 = sadd.s32 %s199, 1
      %p203 = scmp.eq.s32.totalorder %s18, 1
      %p204 = scmp.ne.s32.totalorder %s199, %s201
      %p205 = scmp.eq.s32.totalorder %s18, 0
      %p206 = por %p204, %p205
      %p207 = scmp.ne.s32.totalorder %s199, %s201
      %p208 = scmp.eq.s32.totalorder %s23, 1
      %p209 = por %p207, %p208
      %p210 = scmp.ne.s32.totalorder %s201, %s202
      %p211 = scmp.eq.s32.totalorder %s23, 0
      %p212 = por %p210, %p211
      %p213 = scmp.ne.s32.totalorder %s201, %s202
      %p214 = scmp.eq.s32.totalorder %s24, 1
      %p215 = por %p213, %p214
      %p217 = scmp.ne.s32.totalorder %s202, %s216
      %p218 = scmp.eq.s32.totalorder %s24, 0
      %p219 = por %p217, %p218
      %s220 = ssub.s32 %s18, %s25
      %p221 = scmp.eq.s32.totalorder %s220, 0
      %s223 = sadd.s32 %s222, 1
      %s224 = scalar_select %p221, %s222, %s223
      %p227 = pneg %p221
      %p228 = scmp.eq.s32.totalorder %s18, 1
      %p229 = por %p227, %p228
      %p230 = scmp.ne.s32.totalorder %s222, %s225
      %p231 = scmp.eq.s32.totalorder %s18, 0
      %p232 = por %p230, %p231
      %p233 = scmp.ne.s32.totalorder %s222, %s225
      %p234 = scmp.eq.s32.totalorder %s23, 1
      %p235 = por %p233, %p234
      %p236 = scmp.ne.s32.totalorder %s225, %s226
      %p237 = scmp.eq.s32.totalorder %s23, 0
      %p238 = por %p236, %p237
      %p239 = scmp.ne.s32.totalorder %s225, %s226
      %p240 = scmp.eq.s32.totalorder %s24, 1
      %p241 = por %p239, %p240
      %p243 = scmp.ne.s32.totalorder %s226, %s242
      %p244 = scmp.eq.s32.totalorder %s24, 0
      %p245 = por %p243, %p244
      %p246 = scmp.le.s32.totalorder 1, %s18
      %p247 = scmp.lt.s32.totalorder %s18, 3
      %p248 = pnand %p246, %p247
      %p249 = pneg %p248
      // Predicated region
      $region9: #{carla_encoder_forward.1} parent=5 // pred_check
        _
      $region10: #{carla_encoder_forward.1} parent=5 // pred_check_branch
        %251 = sbr.rel (%p248) target = $region12
      $region11: #{carla_encoder_forward.1} parent=5 // pred_region
        %s252 = ssub.s32 %s18, 1
        // Predicated region
        $region13: #{carla_encoder_forward.1} parent=11 // pred_check
          %p253 = pneg %p65
        $region14: #{carla_encoder_forward.1} parent=11 // pred_check_branch
          %255 = sbr.rel (%p253) target = $region16
        $region15: #{carla_encoder_forward.1} parent=11 // pred_region
          _
        $region16: #{carla_encoder_forward.1} parent=11 // pred_fallthru
          _
        // Predicated region
        $region17: #{carla_encoder_forward.1} parent=11 // pred_check
          %p256 = pneg %p86
        $region18: #{carla_encoder_forward.1} parent=11 // pred_check_branch
          %258 = sbr.rel (%p256) target = $region20
        $region19: #{carla_encoder_forward.1} parent=11 // pred_region
          _
        $region20: #{carla_encoder_forward.1} parent=11 // pred_fallthru
          _
        // Predicated region
        $region21: #{carla_encoder_forward.1} parent=11 // pred_check
          %p259 = pneg %p107
        $region22: #{carla_encoder_forward.1} parent=11 // pred_check_branch
          %261 = sbr.rel (%p259) target = $region24
        $region23: #{carla_encoder_forward.1} parent=11 // pred_region
          _
        $region24: #{carla_encoder_forward.1} parent=11 // pred_fallthru
          _
        // Predicated region
        $region25: #{carla_encoder_forward.1} parent=11 // pred_check
          %p262 = pneg %p128
        $region26: #{carla_encoder_forward.1} parent=11 // pred_check_branch
          %264 = sbr.rel (%p262) target = $region28
        $region27: #{carla_encoder_forward.1} parent=11 // pred_region
          _
        $region28: #{carla_encoder_forward.1} parent=11 // pred_fallthru
          _
        // Predicated region
        $region29: #{carla_encoder_forward.1} parent=11 // pred_check
          %p265 = pneg %p149
        $region30: #{carla_encoder_forward.1} parent=11 // pred_check_branch
          %267 = sbr.rel (%p265) target = $region32
        $region31: #{carla_encoder_forward.1} parent=11 // pred_region
          _
        $region32: #{carla_encoder_forward.1} parent=11 // pred_fallthru
          _
        // Predicated region
        $region33: #{carla_encoder_forward.1} parent=11 // pred_check
          %p268 = pneg %p170
        $region34: #{carla_encoder_forward.1} parent=11 // pred_check_branch
          %270 = sbr.rel (%p268) target = $region36
        $region35: #{carla_encoder_forward.1} parent=11 // pred_region
          _
        $region36: #{carla_encoder_forward.1} parent=11 // pred_fallthru
          _
        // Predicated region
        $region37: #{carla_encoder_forward.1} parent=11 // pred_check
          %p271 = pneg %p191
        $region38: #{carla_encoder_forward.1} parent=11 // pred_check_branch
          %273 = sbr.rel (%p271) target = $region40
        $region39: #{carla_encoder_forward.1} parent=11 // pred_region
          _
        $region40: #{carla_encoder_forward.1} parent=11 // pred_fallthru
          _
        // Predicated region
        $region41: #{carla_encoder_forward.1} parent=11 // pred_check
          %p274 = pneg %p212
        $region42: #{carla_encoder_forward.1} parent=11 // pred_check_branch
          %276 = sbr.rel (%p274) target = $region44
        $region43: #{carla_encoder_forward.1} parent=11 // pred_region
          _
        $region44: #{carla_encoder_forward.1} parent=11 // pred_fallthru
          _
      $region12: #{carla_encoder_forward.1} parent=5 // pred_fallthru
        _
      %p277 = scmp.lt.s32.totalorder %s18, 2
      // Predicated region
      $region45: #{carla_encoder_forward.1} parent=5 // pred_check
        %p278 = pneg %p277
      $region46: #{carla_encoder_forward.1} parent=5 // pred_check_branch
        %280 = sbr.rel (%p278) target = $region48
      $region47: #{carla_encoder_forward.1} parent=5 // pred_region
        // Predicated region
        $region49: #{carla_encoder_forward.1} parent=47 // pred_check
          %p281 = pneg %p38
        $region50: #{carla_encoder_forward.1} parent=47 // pred_check_branch
          %283 = sbr.rel (%p281) target = $region52
        $region51: #{carla_encoder_forward.1} parent=47 // pred_region
          %p284 = scmp.lt.s32.totalorder %s18, 1
          %s285 = scalar_select %p284, %s18, 1
          %s286 = smul.addr %s285, 18
          %s287 = smul.addr %s286, 4
          %s288 = scalar_lea.vmem %s0, %s287
        $region52: #{carla_encoder_forward.1} parent=47 // pred_fallthru
          _
      $region48: #{carla_encoder_forward.1} parent=5 // pred_fallthru
        _
      %p289 = scmp.le.s32.totalorder 1, %s18
      %p290 = scmp.lt.s32.totalorder %s18, 3
      %p291 = pnand %p289, %p290
      %p292 = pneg %p291
      // Predicated region
      $region53: #{carla_encoder_forward.1} parent=5 // pred_check
        _
      $region54: #{carla_encoder_forward.1} parent=5 // pred_check_branch
        %294 = sbr.rel (%p291) target = $region56
      $region55: #{carla_encoder_forward.1} parent=5 // pred_region
        %s295 = ssub.s32 %s18, 1
        %p296 = scmp.lt.s32.totalorder %s23, 1
        %s297 = scalar_select %p296, %s23, 1
        %s298 = smul.addr %s297, 18
        %s299 = smul.addr %s298, 4
        %s300 = scalar_lea.vmem %s0, %s299
        %p301 = pneg %p44
        %p302 = pneg %p41
        %p303 = pneg %p65
        %p304 = pneg %p62
        %p305 = pneg %p86
        %p306 = pneg %p83
        %p307 = pneg %p107
        %p308 = pneg %p104
        %p309 = pneg %p128
        %p310 = pneg %p125
        %p311 = pneg %p149
        %p312 = pneg %p146
        %p313 = pneg %p170
        %p314 = pneg %p167
        %p315 = pneg %p191
        %p316 = pneg %p188
        %p317 = pneg %p212
        %p318 = pneg %p209
        %p319 = pneg %p238
        %p320 = pneg %p235
        %s321 = sand.u32 %s225, 1
        %s322 = scalar_lea.sflag [#allocation3], %s321
        %s323 = sand.u32 %s225, 1
        %s324 = smul.addr %s323, 4
        %s325 = scalar_lea.vmem [#allocation2], %s324
        %p326 = scmp.lt.s32.totalorder %s23, 1
        %s327 = scalar_select %p326, %s23, 1
        %s328 = smul.addr %s327, 18
        %s329 = smul.addr %s328, 4
        %s330 = scalar_lea.vmem %s0, %s329
        %v332 = vld [vmem:[%s330] sm:$0xf]
        %v333 = vld [vmem:[%s330 + $0x4] sm:$0xf]
        %v334 = vld [vmem:[%s330 + $0x8] sm:$0xf]
        %v335 = vld [vmem:[%s330 + $0xc] sm:$0xf]
        %v336 = vld [vmem:[%s330 + $0x10] sm:$0xf]
        %v337 = vld [vmem:[%s330 + $0x14] sm:$0xf]
        %v338 = vld [vmem:[%s330 + $0x18] sm:$0xf]
        %v339 = vld [vmem:[%s330 + $0x1c] sm:$0xf]
        %v340 = vld [vmem:[%s330 + $0x20] sm:$0xf]
        %v341 = vld [vmem:[%s330 + $0x24] sm:$0xf]
        %v342 = vld [vmem:[%s330 + $0x28] sm:$0xf]
        %v343 = vld [vmem:[%s330 + $0x2c] sm:$0xf]
        %v344 = vld [vmem:[%s330 + $0x30] sm:$0xf]
        %v345 = vld [vmem:[%s330 + $0x34] sm:$0xf]
        %v346 = vld [vmem:[%s330 + $0x38] sm:$0xf]
        %v347 = vld [vmem:[%s330 + $0x3c] sm:$0xf]
        %v348 = vld [vmem:[%s330 + $0x40] sm:$0xf]
        %v349 = vld [vmem:[%s330 + $0x44] sm:$0xf]
        %v350 = vld [vmem:[%s1] sm:$0xf]
        %v351 = vld [vmem:[%s1 + $0x4] sm:$0xf]
        %v352 = vld [vmem:[%s1 + $0x8] sm:$0xf]
        %v353 = vld [vmem:[%s1 + $0xc] sm:$0xf]
        %v354 = vld [vmem:[%s1 + $0x10] sm:$0xf]
        %v355 = vld [vmem:[%s1 + $0x14] sm:$0xf]
        %v356 = vld [vmem:[%s1 + $0x18] sm:$0xf]
        %v357 = vld [vmem:[%s1 + $0x1c] sm:$0xf]
        %v358 = vld [vmem:[%s1 + $0x20] sm:$0xf]
        %v359 = vld [vmem:[%s1 + $0x24] sm:$0xf]
        %v360 = vld [vmem:[%s1 + $0x28] sm:$0xf]
        %v361 = vld [vmem:[%s1 + $0x2c] sm:$0xf]
        %v362 = vld [vmem:[%s1 + $0x30] sm:$0xf]
        %v363 = vld [vmem:[%s1 + $0x34] sm:$0xf]
        %v364 = vld [vmem:[%s1 + $0x38] sm:$0xf]
        %v365 = vld [vmem:[%s1 + $0x3c] sm:$0xf]
        %v366 = vld [vmem:[%s2] sm:$0x1]
        %v368 = vlaneseq
        %v369 = vshrl.u32 %v368, 7
        %v370 = vsub.s32 0, %v369
        %v371 = vrot.slane %v366, %v370
        %v391 = vunpack.c.l.b16 %v332
        %v392 = vunpack.c.l.b16 %v333
        %v393 = vunpack.c.l.b16 %v334
        %v394 = vunpack.c.l.b16 %v335
        %v395 = vunpack.c.l.b16 %v336
        %v396 = vunpack.c.l.b16 %v337
        %v397 = vunpack.c.l.b16 %v338
        %v398 = vunpack.c.l.b16 %v339
        %v399 = vunpack.c.l.b16 %v340
        %v400 = vunpack.c.l.b16 %v341
        %v401 = vunpack.c.l.b16 %v342
        %v402 = vunpack.c.l.b16 %v343
        %v403 = vunpack.c.l.b16 %v344
        %v404 = vunpack.c.l.b16 %v345
        %v405 = vunpack.c.l.b16 %v346
        %v406 = vunpack.c.l.b16 %v347
        %v407 = vunpack.c.l.b16 %v348
        %v408 = vunpack.c.l.b16 %v349
        %v409 = vpack.c.b16 %v392, %v391
        %v410 = vpack.c.b16 %v394, %v393
        %v411 = vpack.c.b16 %v396, %v395
        %v412 = vpack.c.b16 %v398, %v397
        %v413 = vpack.c.b16 %v400, %v399
        %v414 = vpack.c.b16 %v402, %v401
        %v415 = vpack.c.b16 %v404, %v403
        %v416 = vpack.c.b16 %v406, %v405
        %v417 = vpack.c.b16 %v408, %v407
        %v443 = vunpack.c.l.b16 %v350
        %v444 = vunpack.c.l.b16 %v351
        %v445 = vunpack.c.l.b16 %v352
        %v446 = vunpack.c.l.b16 %v353
        %v447 = vunpack.c.l.b16 %v354
        %v448 = vunpack.c.l.b16 %v355
        %v449 = vunpack.c.l.b16 %v356
        %v450 = vunpack.c.l.b16 %v357
        %v451 = vunpack.c.l.b16 %v358
        %v452 = vunpack.c.l.b16 %v359
        %v453 = vunpack.c.l.b16 %v360
        %v454 = vunpack.c.l.b16 %v361
        %v455 = vunpack.c.l.b16 %v362
        %v456 = vunpack.c.l.b16 %v363
        %v457 = vunpack.c.l.b16 %v364
        %v458 = vunpack.c.l.b16 %v365
        %v459 = vpack.c.b16 %v444, %v443
        %v460 = vpack.c.b16 %v446, %v445
        %v461 = vpack.c.b16 %v448, %v447
        %v462 = vpack.c.b16 %v450, %v449
        %v463 = vpack.c.b16 %v452, %v451
        %v464 = vpack.c.b16 %v454, %v453
        %v465 = vpack.c.b16 %v456, %v455
        %v466 = vpack.c.b16 %v458, %v457
        %475 = vmatprep.subr.bf16.mxu0 0
        %476 = vmatpush1.bf16.msra.mxu0 %v459
        %477 = vmatprep.subr.bf16.mxu0 0
        %478 = vmatpush1.bf16.msra.mxu0 %v460
        %479 = vmatprep.subr.bf16.mxu0 0
        %480 = vmatpush1.bf16.msra.mxu0 %v461
        %481 = vmatprep.subr.bf16.mxu0 0
        %482 = vmatpush1.bf16.msra.mxu0 %v462
        %483 = vmatprep.subr.bf16.mxu0 0
        %484 = vmatpush1.bf16.msra.mxu0 %v463
        %485 = vmatprep.subr.bf16.mxu0 0
        %486 = vmatpush1.bf16.msra.mxu0 %v464
        %487 = vmatprep.subr.bf16.mxu0 0
        %488 = vmatpush1.bf16.msra.mxu0 %v465
        %489 = vmatprep.subr.bf16.mxu0 0
        %490 = vmatpush1.bf16.msra.mxu0 %v466
        %491 = vmatprep.subr.bf16.mxu0 0
        %492 = vmatpush1.bf16.msra.mxu0 0
        %493 = vmatprep.subr.bf16.mxu0 0
        %494 = vmatpush1.bf16.msra.mxu0 0
        %495 = vmatprep.subr.bf16.mxu0 0
        %496 = vmatpush1.bf16.msra.mxu0 0
        %497 = vmatprep.subr.bf16.mxu0 0
        %498 = vmatpush1.bf16.msra.mxu0 0
        %499 = vmatprep.subr.bf16.mxu0 0
        %500 = vmatpush1.bf16.msra.mxu0 0
        %501 = vmatprep.subr.bf16.mxu0 0
        %502 = vmatpush1.bf16.msra.mxu0 0
        %503 = vmatprep.subr.bf16.mxu0 0
        %504 = vmatpush1.bf16.msra.mxu0 0
        %505 = vmatprep.subr.bf16.mxu0 0
        %506 = vmatpush1.bf16.msra.mxu0 0
        %507 = vmatprep.mubr.bf16.mxu0 0
        %508 = vmatmul.mubr.bf16.gmra.mrb[0].mxu0 %v409
        %v509 = vpop.f32.mrb[0].mxu0
        %v510 = vadd.f32 %v371, %v509
        %v511 = vpop.f32.mrb[0].mxu0
        %v512 = vpop.f32.mrb[0].mxu0
        %v513 = vadd.f32 %v371, %v512
        %v514 = vpop.f32.mrb[0].mxu0
        %515 = vmatprep.mubr.bf16.mxu0 0
        %516 = vmatmul.mubr.bf16.gmra.mrb[0].mxu0 %v410
        %v517 = vpop.f32.mrb[0].mxu0
        %v518 = vadd.f32 %v371, %v517
        %v519 = vpop.f32.mrb[0].mxu0
        %v520 = vpop.f32.mrb[0].mxu0
        %v521 = vadd.f32 %v371, %v520
        %v522 = vpop.f32.mrb[0].mxu0
        %523 = vmatprep.mubr.bf16.mxu0 0
        %524 = vmatmul.mubr.bf16.gmra.mrb[0].mxu0 %v411
        %v525 = vpop.f32.mrb[0].mxu0
        %v526 = vadd.f32 %v371, %v525
        %v527 = vpop.f32.mrb[0].mxu0
        %v528 = vpop.f32.mrb[0].mxu0
        %v529 = vadd.f32 %v371, %v528
        %v530 = vpop.f32.mrb[0].mxu0
        %531 = vmatprep.mubr.bf16.mxu0 0
        %532 = vmatmul.mubr.bf16.gmra.mrb[0].mxu0 %v412
        %v533 = vpop.f32.mrb[0].mxu0
        %v534 = vadd.f32 %v371, %v533
        %v535 = vpop.f32.mrb[0].mxu0
        %v536 = vpop.f32.mrb[0].mxu0
        %v537 = vadd.f32 %v371, %v536
        %v538 = vpop.f32.mrb[0].mxu0
        %539 = vmatprep.mubr.bf16.mxu0 0
        %540 = vmatmul.mubr.bf16.gmra.mrb[0].mxu0 %v413
        %v541 = vpop.f32.mrb[0].mxu0
        %v542 = vadd.f32 %v371, %v541
        %v543 = vpop.f32.mrb[0].mxu0
        %v544 = vpop.f32.mrb[0].mxu0
        %v545 = vadd.f32 %v371, %v544
        %v546 = vpop.f32.mrb[0].mxu0
        %547 = vmatprep.mubr.bf16.mxu0 0
        %548 = vmatmul.mubr.bf16.gmra.mrb[0].mxu0 %v414
        %v549 = vpop.f32.mrb[0].mxu0
        %v550 = vadd.f32 %v371, %v549
        %v551 = vpop.f32.mrb[0].mxu0
        %v552 = vpop.f32.mrb[0].mxu0
        %v553 = vadd.f32 %v371, %v552
        %v554 = vpop.f32.mrb[0].mxu0
        %555 = vmatprep.mubr.bf16.mxu0 0
        %556 = vmatmul.mubr.bf16.gmra.mrb[0].mxu0 %v415
        %v557 = vpop.f32.mrb[0].mxu0
        %v558 = vadd.f32 %v371, %v557
        %v559 = vpop.f32.mrb[0].mxu0
        %v560 = vpop.f32.mrb[0].mxu0
        %v561 = vadd.f32 %v371, %v560
        %v562 = vpop.f32.mrb[0].mxu0
        %563 = vmatprep.mubr.bf16.mxu0 0
        %564 = vmatmul.mubr.bf16.gmra.mrb[0].mxu0 %v416
        %v565 = vpop.f32.mrb[0].mxu0
        %v566 = vadd.f32 %v371, %v565
        %v567 = vpop.f32.mrb[0].mxu0
        %v568 = vpop.f32.mrb[0].mxu0
        %v569 = vadd.f32 %v371, %v568
        %v570 = vpop.f32.mrb[0].mxu0
        %571 = vmatprep.mubr.bf16.mxu0 0
        %572 = vmatmul.mubr.bf16.gmra.mrb[0].mxu0 %v417
        %v573 = vpop.f32.mrb[0].mxu0
        %v574 = vpop.f32.mrb[0].mxu0
        %v575 = vpop.f32.mrb[0].mxu0
        %v576 = vpop.f32.mrb[0].mxu0
        %577 = vdwg.mxu0
        %v578 = vmax.f32 %v510, 0.0
        %v579 = vmax.f32 %v513, 0.0
        %v580 = vmax.f32 %v518, 0.0
        %v581 = vmax.f32 %v521, 0.0
        %v582 = vmax.f32 %v526, 0.0
        %v583 = vmax.f32 %v529, 0.0
        %v584 = vmax.f32 %v534, 0.0
        %v585 = vmax.f32 %v537, 0.0
        %v586 = vmax.f32 %v542, 0.0
        %v587 = vmax.f32 %v545, 0.0
        %v588 = vmax.f32 %v550, 0.0
        %v589 = vmax.f32 %v553, 0.0
        %v590 = vmax.f32 %v558, 0.0
        %v591 = vmax.f32 %v561, 0.0
        %v592 = vmax.f32 %v566, 0.0
        %v593 = vmax.f32 %v569, 0.0
        %v594 = vpack.c.bf16 %v579, %v578
        %v595 = vpack.c.bf16 %v581, %v580
        %v596 = vpack.c.bf16 %v583, %v582
        %v597 = vpack.c.bf16 %v585, %v584
        %v598 = vpack.c.bf16 %v587, %v586
        %v599 = vpack.c.bf16 %v589, %v588
        %v600 = vpack.c.bf16 %v591, %v590
        %v601 = vpack.c.bf16 %v593, %v592
        %v603 = vrot.slane %v594, 2
        %604 = vrot.lane.b32.xlu0 %v603, 64
        %v605 = vpop.permute.xlu0 %604
        %v606 = vrot.slane %v594, 4
        %v608 = vrot.slane %v595, 4
        %609 = vrot.lane.b32.xlu0 %v608, 64
        %v610 = vpop.permute.xlu0 %609
        %v611 = vrot.slane %v595, 6
        %613 = vrot.lane.b32.xlu0 %v596, 64
        %v614 = vpop.permute.xlu0 %613
        %v616 = vrot.slane %v597, 2
        %617 = vrot.lane.b32.xlu0 %v616, 64
        %v618 = vpop.permute.xlu0 %617
        %v619 = vrot.slane %v597, 4
        %vm620 = vcmask 523264
        %v623 = vsel %vm620, %v594, %v605
        %v627 = vsel %vm620, %v606, %v610
        %v631 = vsel %vm620, %v611, %v614
        %v635 = vsel %vm620, %v597, %v618
        %v637 = vld [vmem:[%s3] sm:$0xf]
        %v638 = vld [vmem:[%s3 + $0x4] sm:$0xf]
        %v639 = vld [vmem:[%s3 + $0x8] sm:$0xf]
        %v640 = vld [vmem:[%s3 + $0xc] sm:$0xf]
        %v641 = vld [vmem:[%s3 + $0x10] sm:$0xf]
        %v642 = vld [vmem:[%s3 + $0x14] sm:$0xf]
        %v643 = vld [vmem:[%s3 + $0x18] sm:$0xf]
        %v644 = vld [vmem:[%s3 + $0x1c] sm:$0xf]
        %v645 = vld [vmem:[%s3 + $0x20] sm:$0xf]
        %v646 = vld [vmem:[%s3 + $0x24] sm:$0xf]
        %v647 = vld [vmem:[%s3 + $0x28] sm:$0xf]
        %v648 = vld [vmem:[%s3 + $0x2c] sm:$0xf]
        %v649 = vld [vmem:[%s3 + $0x30] sm:$0xf]
        %v650 = vld [vmem:[%s3 + $0x34] sm:$0xf]
        %v651 = vld [vmem:[%s3 + $0x38] sm:$0xf]
        %v652 = vld [vmem:[%s3 + $0x3c] sm:$0xf]
        %v653 = vld [vmem:[%s3 + $0x40] sm:$0xf]
        %v654 = vld [vmem:[%s3 + $0x44] sm:$0xf]
        %v655 = vld [vmem:[%s3 + $0x48] sm:$0xf]
        %v656 = vld [vmem:[%s3 + $0x4c] sm:$0xf]
        %v657 = vld [vmem:[%s3 + $0x50] sm:$0xf]
        %v658 = vld [vmem:[%s3 + $0x54] sm:$0xf]
        %v659 = vld [vmem:[%s3 + $0x58] sm:$0xf]
        %v660 = vld [vmem:[%s3 + $0x5c] sm:$0xf]
        %v661 = vld [vmem:[%s3 + $0x60] sm:$0xf]
        %v662 = vld [vmem:[%s3 + $0x64] sm:$0xf]
        %v663 = vld [vmem:[%s3 + $0x68] sm:$0xf]
        %v664 = vld [vmem:[%s3 + $0x6c] sm:$0xf]
        %v665 = vld [vmem:[%s3 + $0x70] sm:$0xf]
        %v666 = vld [vmem:[%s3 + $0x74] sm:$0xf]
        %v667 = vld [vmem:[%s3 + $0x78] sm:$0xf]
        %v668 = vld [vmem:[%s3 + $0x7c] sm:$0xf]
        %v669 = vld [vmem:[%s3 + $0x80] sm:$0xf]
        %v670 = vld [vmem:[%s3 + $0x84] sm:$0xf]
        %v671 = vld [vmem:[%s3 + $0x88] sm:$0xf]
        %v672 = vld [vmem:[%s3 + $0x8c] sm:$0xf]
        %v673 = vld [vmem:[%s3 + $0x90] sm:$0xf]
        %v674 = vld [vmem:[%s3 + $0x94] sm:$0xf]
        %v675 = vld [vmem:[%s3 + $0x98] sm:$0xf]
        %v676 = vld [vmem:[%s3 + $0x9c] sm:$0xf]
        %v677 = vld [vmem:[%s3 + $0xa0] sm:$0xf]
        %v678 = vld [vmem:[%s3 + $0xa4] sm:$0xf]
        %v679 = vld [vmem:[%s3 + $0xa8] sm:$0xf]
        %v680 = vld [vmem:[%s3 + $0xac] sm:$0xf]
        %v681 = vld [vmem:[%s3 + $0xb0] sm:$0xf]
        %v682 = vld [vmem:[%s3 + $0xb4] sm:$0xf]
        %v683 = vld [vmem:[%s3 + $0xb8] sm:$0xf]
        %v684 = vld [vmem:[%s3 + $0xbc] sm:$0xf]
        %v685 = vld [vmem:[%s3 + $0xc0] sm:$0xf]
        %v686 = vld [vmem:[%s3 + $0xc4] sm:$0xf]
        %v687 = vld [vmem:[%s3 + $0xc8] sm:$0xf]
        %v688 = vld [vmem:[%s3 + $0xcc] sm:$0xf]
        %v689 = vld [vmem:[%s3 + $0xd0] sm:$0xf]
        %v690 = vld [vmem:[%s3 + $0xd4] sm:$0xf]
        %v691 = vld [vmem:[%s3 + $0xd8] sm:$0xf]
        %v692 = vld [vmem:[%s3 + $0xdc] sm:$0xf]
        %v693 = vld [vmem:[%s3 + $0xe0] sm:$0xf]
        %v694 = vld [vmem:[%s3 + $0xe4] sm:$0xf]
        %v695 = vld [vmem:[%s3 + $0xe8] sm:$0xf]
        %v696 = vld [vmem:[%s3 + $0xec] sm:$0xf]
        %v697 = vld [vmem:[%s3 + $0xf0] sm:$0xf]
        %v698 = vld [vmem:[%s3 + $0xf4] sm:$0xf]
        %v699 = vld [vmem:[%s3 + $0xf8] sm:$0xf]
        %v700 = vld [vmem:[%s3 + $0xfc] sm:$0xf]
        %v701 = vld [vmem:[%s3 + $0x100] sm:$0xf]
        %v702 = vld [vmem:[%s3 + $0x104] sm:$0xf]
        %v703 = vld [vmem:[%s3 + $0x108] sm:$0xf]
        %v704 = vld [vmem:[%s3 + $0x10c] sm:$0xf]
        %v705 = vld [vmem:[%s3 + $0x110] sm:$0xf]
        %v706 = vld [vmem:[%s3 + $0x114] sm:$0xf]
        %v707 = vld [vmem:[%s3 + $0x118] sm:$0xf]
        %v708 = vld [vmem:[%s3 + $0x11c] sm:$0xf]
        %v709 = vld [vmem:[%s4] sm:$0x1]
        %v711 = vlaneseq
        %v712 = vshrl.u32 %v711, 7
        %v713 = vsub.s32 0, %v712
        %v714 = vrot.slane %v709, %v713
        %v788 = vunpack.c.l.b16 %v637
        %v789 = vunpack.c.l.b16 %v638
        %v790 = vunpack.c.l.b16 %v639
        %v791 = vunpack.c.l.b16 %v640
        %v792 = vunpack.c.l.b16 %v641
        %v793 = vunpack.c.l.b16 %v642
        %v794 = vunpack.c.l.b16 %v643
        %v795 = vunpack.c.l.b16 %v644
        %v796 = vunpack.c.l.b16 %v645
        %v797 = vunpack.c.l.b16 %v646
        %v798 = vunpack.c.l.b16 %v647
        %v799 = vunpack.c.l.b16 %v648
        %v800 = vunpack.c.l.b16 %v649
        %v801 = vunpack.c.l.b16 %v650
        %v802 = vunpack.c.l.b16 %v651
        %v803 = vunpack.c.l.b16 %v652
        %v804 = vunpack.c.l.b16 %v653
        %v805 = vunpack.c.l.b16 %v654
        %v806 = vunpack.c.l.b16 %v655
        %v807 = vunpack.c.l.b16 %v656
        %v808 = vunpack.c.l.b16 %v657
        %v809 = vunpack.c.l.b16 %v658
        %v810 = vunpack.c.l.b16 %v659
        %v811 = vunpack.c.l.b16 %v660
        %v812 = vunpack.c.l.b16 %v661
        %v813 = vunpack.c.l.b16 %v662
        %v814 = vunpack.c.l.b16 %v663
        %v815 = vunpack.c.l.b16 %v664
        %v816 = vunpack.c.l.b16 %v665
        %v817 = vunpack.c.l.b16 %v666
        %v818 = vunpack.c.l.b16 %v667
        %v819 = vunpack.c.l.b16 %v668
        %v820 = vunpack.c.l.b16 %v669
        %v821 = vunpack.c.l.b16 %v670
        %v822 = vunpack.c.l.b16 %v671
        %v823 = vunpack.c.l.b16 %v672
        %v824 = vunpack.c.l.b16 %v673
        %v825 = vunpack.c.l.b16 %v674
        %v826 = vunpack.c.l.b16 %v675
        %v827 = vunpack.c.l.b16 %v676
        %v828 = vunpack.c.l.b16 %v677
        %v829 = vunpack.c.l.b16 %v678
        %v830 = vunpack.c.l.b16 %v679
        %v831 = vunpack.c.l.b16 %v680
        %v832 = vunpack.c.l.b16 %v681
        %v833 = vunpack.c.l.b16 %v682
        %v834 = vunpack.c.l.b16 %v683
        %v835 = vunpack.c.l.b16 %v684
        %v836 = vunpack.c.l.b16 %v685
        %v837 = vunpack.c.l.b16 %v686
        %v838 = vunpack.c.l.b16 %v687
        %v839 = vunpack.c.l.b16 %v688
        %v840 = vunpack.c.l.b16 %v689
        %v841 = vunpack.c.l.b16 %v690
        %v842 = vunpack.c.l.b16 %v691
        %v843 = vunpack.c.l.b16 %v692
        %v844 = vunpack.c.l.b16 %v693
        %v845 = vunpack.c.l.b16 %v694
        %v846 = vunpack.c.l.b16 %v695
        %v847 = vunpack.c.l.b16 %v696
        %v848 = vunpack.c.l.b16 %v697
        %v849 = vunpack.c.l.b16 %v698
        %v850 = vunpack.c.l.b16 %v699
        %v851 = vunpack.c.l.b16 %v700
        %v852 = vunpack.c.l.b16 %v701
        %v853 = vunpack.c.l.b16 %v702
        %v854 = vunpack.c.l.b16 %v703
        %v855 = vunpack.c.l.b16 %v704
        %v856 = vunpack.c.l.b16 %v705
        %v857 = vunpack.c.l.b16 %v706
        %v858 = vunpack.c.l.b16 %v707
        %v859 = vunpack.c.l.b16 %v708
        %v860 = vpack.c.b16 %v789, %v788
        %v861 = vpack.c.b16 %v791, %v790
        %v862 = vpack.c.b16 %v793, %v792
        %v863 = vpack.c.b16 %v795, %v794
        %v864 = vpack.c.b16 %v797, %v796
        %v865 = vpack.c.b16 %v799, %v798
        %v866 = vpack.c.b16 %v801, %v800
        %v867 = vpack.c.b16 %v803, %v802
        %v868 = vpack.c.b16 %v805, %v804
        %v869 = vpack.c.b16 %v807, %v806
        %v870 = vpack.c.b16 %v809, %v808
        %v871 = vpack.c.b16 %v811, %v810
        %v872 = vpack.c.b16 %v813, %v812
        %v873 = vpack.c.b16 %v815, %v814
        %v874 = vpack.c.b16 %v817, %v816
        %v875 = vpack.c.b16 %v819, %v818
        %v876 = vpack.c.b16 %v821, %v820
        %v877 = vpack.c.b16 %v823, %v822
        %v878 = vpack.c.b16 %v825, %v824
        %v879 = vpack.c.b16 %v827, %v826
        %v880 = vpack.c.b16 %v829, %v828
        %v881 = vpack.c.b16 %v831, %v830
        %v882 = vpack.c.b16 %v833, %v832
        %v883 = vpack.c.b16 %v835, %v834
        %v884 = vpack.c.b16 %v837, %v836
        %v885 = vpack.c.b16 %v839, %v838
        %v886 = vpack.c.b16 %v841, %v840
        %v887 = vpack.c.b16 %v843, %v842
        %v888 = vpack.c.b16 %v845, %v844
        %v889 = vpack.c.b16 %v847, %v846
        %v890 = vpack.c.b16 %v849, %v848
        %v891 = vpack.c.b16 %v851, %v850
        %v892 = vpack.c.b16 %v853, %v852
        %v893 = vpack.c.b16 %v855, %v854
        %v894 = vpack.c.b16 %v857, %v856
        %v895 = vpack.c.b16 %v859, %v858
        %v933 = vsel %vm620, %v619, 0
        %935 = vmatprep.subr.bf16.mxu0 0
        %936 = vmatpush1.bf16.msra.mxu0 %v860
        %937 = vmatprep.subr.bf16.mxu0 0
        %938 = vmatpush1.bf16.msra.mxu0 %v861
        %939 = vmatprep.subr.bf16.mxu0 0
        %940 = vmatpush1.bf16.msra.mxu0 %v862
        %941 = vmatprep.subr.bf16.mxu0 0
        %942 = vmatpush1.bf16.msra.mxu0 %v863
        %943 = vmatprep.subr.bf16.mxu0 0
        %944 = vmatpush1.bf16.msra.mxu0 %v864
        %945 = vmatprep.subr.bf16.mxu0 0
        %946 = vmatpush1.bf16.msra.mxu0 %v865
        %947 = vmatprep.subr.bf16.mxu0 0
        %948 = vmatpush1.bf16.msra.mxu0 %v866
        %949 = vmatprep.subr.bf16.mxu0 0
        %950 = vmatpush1.bf16.msra.mxu0 %v867
        %951 = vmatprep.subr.bf16.mxu0 0
        %952 = vmatpush1.bf16.msra.mxu0 %v868
        %953 = vmatprep.subr.bf16.mxu0 0
        %954 = vmatpush1.bf16.msra.mxu0 %v869
        %955 = vmatprep.subr.bf16.mxu0 0
        %956 = vmatpush1.bf16.msra.mxu0 %v870
        %957 = vmatprep.subr.bf16.mxu0 0
        %958 = vmatpush1.bf16.msra.mxu0 %v871
        %959 = vmatprep.subr.bf16.mxu0 0
        %960 = vmatpush1.bf16.msra.mxu0 %v872
        %961 = vmatprep.subr.bf16.mxu0 0
        %962 = vmatpush1.bf16.msra.mxu0 %v873
        %963 = vmatprep.subr.bf16.mxu0 0
        %964 = vmatpush1.bf16.msra.mxu0 %v874
        %965 = vmatprep.subr.bf16.mxu0 0
        %966 = vmatpush1.bf16.msra.mxu0 %v875
        %967 = vmatprep.mubr.bf16.mxu0 %v627
        %968 = vmatmul.mubr.bf16.gmra.mrb[0].mxu0 %v623
        %v969 = vpop.f32.mrb[0].mxu0
        %v970 = vadd.f32 %v714, %v969
        %v971 = vpop.f32.mrb[0].mxu0
        %v972 = vpop.f32.mrb[0].mxu0
        %v973 = vpop.f32.mrb[0].mxu0
        %974 = vdwg.mxu0
        %975 = vmatprep.subr.bf16.mxu0 0
        %976 = vmatpush1.bf16.msra.mxu0 %v876
        %977 = vmatprep.subr.bf16.mxu0 0
        %978 = vmatpush1.bf16.msra.mxu0 %v877
        %979 = vmatprep.subr.bf16.mxu0 0
        %980 = vmatpush1.bf16.msra.mxu0 %v878
        %981 = vmatprep.subr.bf16.mxu0 0
        %982 = vmatpush1.bf16.msra.mxu0 %v879
        %983 = vmatprep.subr.bf16.mxu0 0
        %984 = vmatpush1.bf16.msra.mxu0 %v880
        %985 = vmatprep.subr.bf16.mxu0 0
        %986 = vmatpush1.bf16.msra.mxu0 %v881
        %987 = vmatprep.subr.bf16.mxu0 0
        %988 = vmatpush1.bf16.msra.mxu0 %v882
        %989 = vmatprep.subr.bf16.mxu0 0
        %990 = vmatpush1.bf16.msra.mxu0 %v883
        %991 = vmatprep.subr.bf16.mxu0 0
        %992 = vmatpush1.bf16.msra.mxu0 %v884
        %993 = vmatprep.subr.bf16.mxu0 0
        %994 = vmatpush1.bf16.msra.mxu0 %v885
        %995 = vmatprep.subr.bf16.mxu0 0
        %996 = vmatpush1.bf16.msra.mxu0 %v886
        %997 = vmatprep.subr.bf16.mxu0 0
        %998 = vmatpush1.bf16.msra.mxu0 %v887
        %999 = vmatprep.subr.bf16.mxu0 0
        %1000 = vmatpush1.bf16.msra.mxu0 %v888
        %1001 = vmatprep.subr.bf16.mxu0 0
        %1002 = vmatpush1.bf16.msra.mxu0 %v889
        %1003 = vmatprep.subr.bf16.mxu0 0
        %1004 = vmatpush1.bf16.msra.mxu0 %v890
        %1005 = vmatprep.subr.bf16.mxu0 0
        %1006 = vmatpush1.bf16.msra.mxu0 %v891
        %1007 = vmatprep.mubr.bf16.mxu0 %v635
        %1008 = vmatmul.mubr.bf16.gmra.mrb[0].mxu0 %v631
        %v1009 = vpop.f32.mrb[0].mxu0
        %v1010 = vadd.f32 %v970, %v1009
        %v1011 = vpop.f32.mrb[0].mxu0
        %v1012 = vpop.f32.mrb[0].mxu0
        %v1013 = vpop.f32.mrb[0].mxu0
        %1014 = vdwg.mxu0
        %1015 = vmatprep.subr.bf16.mxu0 0
        %1016 = vmatpush1.bf16.msra.mxu0 %v892
        %1017 = vmatprep.subr.bf16.mxu0 0
        %1018 = vmatpush1.bf16.msra.mxu0 %v893
        %1019 = vmatprep.subr.bf16.mxu0 0
        %1020 = vmatpush1.bf16.msra.mxu0 %v894
        %1021 = vmatprep.subr.bf16.mxu0 0
        %1022 = vmatpush1.bf16.msra.mxu0 %v895
        %1023 = vmatprep.subr.bf16.mxu0 0
        %1024 = vmatpush1.bf16.msra.mxu0 0
        %1025 = vmatprep.subr.bf16.mxu0 0
        %1026 = vmatpush1.bf16.msra.mxu0 0
        %1027 = vmatprep.subr.bf16.mxu0 0
        %1028 = vmatpush1.bf16.msra.mxu0 0
        %1029 = vmatprep.subr.bf16.mxu0 0
        %1030 = vmatpush1.bf16.msra.mxu0 0
        %1031 = vmatprep.subr.bf16.mxu0 0
        %1032 = vmatpush1.bf16.msra.mxu0 0
        %1033 = vmatprep.subr.bf16.mxu0 0
        %1034 = vmatpush1.bf16.msra.mxu0 0
        %1035 = vmatprep.subr.bf16.mxu0 0
        %1036 = vmatpush1.bf16.msra.mxu0 0
        %1037 = vmatprep.subr.bf16.mxu0 0
        %1038 = vmatpush1.bf16.msra.mxu0 0
        %1039 = vmatprep.subr.bf16.mxu0 0
        %1040 = vmatpush1.bf16.msra.mxu0 0
        %1041 = vmatprep.subr.bf16.mxu0 0
        %1042 = vmatpush1.bf16.msra.mxu0 0
        %1043 = vmatprep.subr.bf16.mxu0 0
        %1044 = vmatpush1.bf16.msra.mxu0 0
        %1045 = vmatprep.subr.bf16.mxu0 0
        %1046 = vmatpush1.bf16.msra.mxu0 0
        %1047 = vmatprep.mubr.bf16.mxu0 0
        %1048 = vmatmul.mubr.bf16.gmra.mrb[0].mxu0 %v933
        %v1049 = vpop.f32.mrb[0].mxu0
        %v1050 = vadd.f32 %v1010, %v1049
        %v1051 = vpop.f32.mrb[0].mxu0
        %v1052 = vpop.f32.mrb[0].mxu0
        %v1053 = vpop.f32.mrb[0].mxu0
        %1054 = vdwg.mxu0
        %v1055 = vmax.f32 %v1050, 0.0
        %v1056 = vpack.c.bf16 %v1055, %v1055
        %v1057 = vrot.slane %v596, 4
        %1058 = vrot.lane.b32.xlu0 %v1057, 64
        %v1059 = vpop.permute.xlu0 %1058
        %v1060 = vrot.slane %v596, 6
        %v1062 = vrot.slane %v598, 4
        %v1065 = vsel %vm620, %v608, %v1059
        %v1067 = vsel %vm620, %v1060, %v614
        %v1072 = vrot.slane %v623, 4
        %v1073 = vrot.slane %v1065, 4
        %v1074 = vrot.slane %v1067, 4
        %v1075 = vrot.slane %v635, 4
        %v1076 = vrot.slane %v1062, 4
        %v1082 = vsel %vm620, %v1076, 0
        %1084 = vmatprep.subr.bf16.mxu0 0
        %1085 = vmatpush1.bf16.msra.mxu0 %v860
        %1086 = vmatprep.subr.bf16.mxu0 0
        %1087 = vmatpush1.bf16.msra.mxu0 %v861
        %1088 = vmatprep.subr.bf16.mxu0 0
        %1089 = vmatpush1.bf16.msra.mxu0 %v862
        %1090 = vmatprep.subr.bf16.mxu0 0
        %1091 = vmatpush1.bf16.msra.mxu0 %v863
        %1092 = vmatprep.subr.bf16.mxu0 0
        %1093 = vmatpush1.bf16.msra.mxu0 %v864
        %1094 = vmatprep.subr.bf16.mxu0 0
        %1095 = vmatpush1.bf16.msra.mxu0 %v865
        %1096 = vmatprep.subr.bf16.mxu0 0
        %1097 = vmatpush1.bf16.msra.mxu0 %v866
        %1098 = vmatprep.subr.bf16.mxu0 0
        %1099 = vmatpush1.bf16.msra.mxu0 %v867
        %1100 = vmatprep.subr.bf16.mxu0 0
        %1101 = vmatpush1.bf16.msra.mxu0 %v868
        %1102 = vmatprep.subr.bf16.mxu0 0
        %1103 = vmatpush1.bf16.msra.mxu0 %v869
        %1104 = vmatprep.subr.bf16.mxu0 0
        %1105 = vmatpush1.bf16.msra.mxu0 %v870
        %1106 = vmatprep.subr.bf16.mxu0 0
        %1107 = vmatpush1.bf16.msra.mxu0 %v871
        %1108 = vmatprep.subr.bf16.mxu0 0
        %1109 = vmatpush1.bf16.msra.mxu0 %v872
        %1110 = vmatprep.subr.bf16.mxu0 0
        %1111 = vmatpush1.bf16.msra.mxu0 %v873
        %1112 = vmatprep.subr.bf16.mxu0 0
        %1113 = vmatpush1.bf16.msra.mxu0 %v874
        %1114 = vmatprep.subr.bf16.mxu0 0
        %1115 = vmatpush1.bf16.msra.mxu0 %v875
        %1116 = vmatprep.mubr.bf16.mxu0 %v1073
        %1117 = vmatmul.mubr.bf16.gmra.mrb[0].mxu0 %v1072
        %v1118 = vpop.f32.mrb[0].mxu0
        %v1119 = vadd.f32 %v714, %v1118
        %v1120 = vpop.f32.mrb[0].mxu0
        %v1121 = vpop.f32.mrb[0].mxu0
        %v1122 = vpop.f32.mrb[0].mxu0
        %1123 = vdwg.mxu0
        %1124 = vmatprep.subr.bf16.mxu0 0
        %1125 = vmatpush1.bf16.msra.mxu0 %v876
        %1126 = vmatprep.subr.bf16.mxu0 0
        %1127 = vmatpush1.bf16.msra.mxu0 %v877
        %1128 = vmatprep.subr.bf16.mxu0 0
        %1129 = vmatpush1.bf16.msra.mxu0 %v878
        %1130 = vmatprep.subr.bf16.mxu0 0
        %1131 = vmatpush1.bf16.msra.mxu0 %v879
        %1132 = vmatprep.subr.bf16.mxu0 0
        %1133 = vmatpush1.bf16.msra.mxu0 %v880
        %1134 = vmatprep.subr.bf16.mxu0 0
        %1135 = vmatpush1.bf16.msra.mxu0 %v881
        %1136 = vmatprep.subr.bf16.mxu0 0
        %1137 = vmatpush1.bf16.msra.mxu0 %v882
        %1138 = vmatprep.subr.bf16.mxu0 0
        %1139 = vmatpush1.bf16.msra.mxu0 %v883
        %1140 = vmatprep.subr.bf16.mxu0 0
        %1141 = vmatpush1.bf16.msra.mxu0 %v884
        %1142 = vmatprep.subr.bf16.mxu0 0
        %1143 = vmatpush1.bf16.msra.mxu0 %v885
        %1144 = vmatprep.subr.bf16.mxu0 0
        %1145 = vmatpush1.bf16.msra.mxu0 %v886
        %1146 = vmatprep.subr.bf16.mxu0 0
        %1147 = vmatpush1.bf16.msra.mxu0 %v887
        %1148 = vmatprep.subr.bf16.mxu0 0
        %1149 = vmatpush1.bf16.msra.mxu0 %v888
        %1150 = vmatprep.subr.bf16.mxu0 0
        %1151 = vmatpush1.bf16.msra.mxu0 %v889
        %1152 = vmatprep.subr.bf16.mxu0 0
        %1153 = vmatpush1.bf16.msra.mxu0 %v890
        %1154 = vmatprep.subr.bf16.mxu0 0
        %1155 = vmatpush1.bf16.msra.mxu0 %v891
        %1156 = vmatprep.mubr.bf16.mxu0 %v1075
        %1157 = vmatmul.mubr.bf16.gmra.mrb[0].mxu0 %v1074
        %v1158 = vpop.f32.mrb[0].mxu0
        %v1159 = vadd.f32 %v1119, %v1158
        %v1160 = vpop.f32.mrb[0].mxu0
        %v1161 = vpop.f32.mrb[0].mxu0
        %v1162 = vpop.f32.mrb[0].mxu0
        %1163 = vdwg.mxu0
        %1164 = vmatprep.subr.bf16.mxu0 0
        %1165 = vmatpush1.bf16.msra.mxu0 %v892
        %1166 = vmatprep.subr.bf16.mxu0 0
        %1167 = vmatpush1.bf16.msra.mxu0 %v893
        %1168 = vmatprep.subr.bf16.mxu0 0
        %1169 = vmatpush1.bf16.msra.mxu0 %v894
        %1170 = vmatprep.subr.bf16.mxu0 0
        %1171 = vmatpush1.bf16.msra.mxu0 %v895
        %1172 = vmatprep.subr.bf16.mxu0 0
        %1173 = vmatpush1.bf16.msra.mxu0 0
        %1174 = vmatprep.subr.bf16.mxu0 0
        %1175 = vmatpush1.bf16.msra.mxu0 0
        %1176 = vmatprep.subr.bf16.mxu0 0
        %1177 = vmatpush1.bf16.msra.mxu0 0
        %1178 = vmatprep.subr.bf16.mxu0 0
        %1179 = vmatpush1.bf16.msra.mxu0 0
        %1180 = vmatprep.subr.bf16.mxu0 0
        %1181 = vmatpush1.bf16.msra.mxu0 0
        %1182 = vmatprep.subr.bf16.mxu0 0
        %1183 = vmatpush1.bf16.msra.mxu0 0
        %1184 = vmatprep.subr.bf16.mxu0 0
        %1185 = vmatpush1.bf16.msra.mxu0 0
        %1186 = vmatprep.subr.bf16.mxu0 0
        %1187 = vmatpush1.bf16.msra.mxu0 0
        %1188 = vmatprep.subr.bf16.mxu0 0
        %1189 = vmatpush1.bf16.msra.mxu0 0
        %1190 = vmatprep.subr.bf16.mxu0 0
        %1191 = vmatpush1.bf16.msra.mxu0 0
        %1192 = vmatprep.subr.bf16.mxu0 0
        %1193 = vmatpush1.bf16.msra.mxu0 0
        %1194 = vmatprep.subr.bf16.mxu0 0
        %1195 = vmatpush1.bf16.msra.mxu0 0
        %1196 = vmatprep.mubr.bf16.mxu0 0
        %1197 = vmatmul.mubr.bf16.gmra.mrb[0].mxu0 %v1082
        %v1198 = vpop.f32.mrb[0].mxu0
        %v1199 = vadd.f32 %v1159, %v1198
        %v1200 = vpop.f32.mrb[0].mxu0
        %v1201 = vpop.f32.mrb[0].mxu0
        %v1202 = vpop.f32.mrb[0].mxu0
        %1203 = vdwg.mxu0
        %v1204 = vmax.f32 %v1199, 0.0
        %v1205 = vpack.c.bf16 %v1204, %v1204
        %1206 = vrot.lane.b32.xlu0 %v1062, 64
        %v1207 = vpop.permute.xlu0 %1206
        %v1208 = vrot.slane %v598, 6
        %1210 = vrot.lane.b32.xlu0 %v599, 64
        %v1211 = vpop.permute.xlu0 %1210
        %v1213 = vrot.slane %v600, 2
        %1214 = vrot.lane.b32.xlu0 %v1213, 64
        %v1215 = vpop.permute.xlu0 %1214
        %v1216 = vrot.slane %v600, 4
        %v1218 = vsel %vm620, %v619, %v1207
        %v1222 = vsel %vm620, %v1208, %v1211
        %v1226 = vsel %vm620, %v600, %v1215
        %v1229 = vsel %vm620, %v1216, 0
        %1231 = vmatprep.subr.bf16.mxu0 0
        %1232 = vmatpush1.bf16.msra.mxu0 %v860
        %1233 = vmatprep.subr.bf16.mxu0 0
        %1234 = vmatpush1.bf16.msra.mxu0 %v861
        %1235 = vmatprep.subr.bf16.mxu0 0
        %1236 = vmatpush1.bf16.msra.mxu0 %v862
        %1237 = vmatprep.subr.bf16.mxu0 0
        %1238 = vmatpush1.bf16.msra.mxu0 %v863
        %1239 = vmatprep.subr.bf16.mxu0 0
        %1240 = vmatpush1.bf16.msra.mxu0 %v864
        %1241 = vmatprep.subr.bf16.mxu0 0
        %1242 = vmatpush1.bf16.msra.mxu0 %v865
        %1243 = vmatprep.subr.bf16.mxu0 0
        %1244 = vmatpush1.bf16.msra.mxu0 %v866
        %1245 = vmatprep.subr.bf16.mxu0 0
        %1246 = vmatpush1.bf16.msra.mxu0 %v867
        %1247 = vmatprep.subr.bf16.mxu0 0
        %1248 = vmatpush1.bf16.msra.mxu0 %v868
        %1249 = vmatprep.subr.bf16.mxu0 0
        %1250 = vmatpush1.bf16.msra.mxu0 %v869
        %1251 = vmatprep.subr.bf16.mxu0 0
        %1252 = vmatpush1.bf16.msra.mxu0 %v870
        %1253 = vmatprep.subr.bf16.mxu0 0
        %1254 = vmatpush1.bf16.msra.mxu0 %v871
        %1255 = vmatprep.subr.bf16.mxu0 0
        %1256 = vmatpush1.bf16.msra.mxu0 %v872
        %1257 = vmatprep.subr.bf16.mxu0 0
        %1258 = vmatpush1.bf16.msra.mxu0 %v873
        %1259 = vmatprep.subr.bf16.mxu0 0
        %1260 = vmatpush1.bf16.msra.mxu0 %v874
        %1261 = vmatprep.subr.bf16.mxu0 0
        %1262 = vmatpush1.bf16.msra.mxu0 %v875
        %1263 = vmatprep.mubr.bf16.mxu0 %v1218
        %1264 = vmatmul.mubr.bf16.gmra.mrb[0].mxu0 %v635
        %v1265 = vpop.f32.mrb[0].mxu0
        %v1266 = vadd.f32 %v714, %v1265
        %v1267 = vpop.f32.mrb[0].mxu0
        %v1268 = vpop.f32.mrb[0].mxu0
        %v1269 = vpop.f32.mrb[0].mxu0
        %1270 = vdwg.mxu0
        %1271 = vmatprep.subr.bf16.mxu0 0
        %1272 = vmatpush1.bf16.msra.mxu0 %v876
        %1273 = vmatprep.subr.bf16.mxu0 0
        %1274 = vmatpush1.bf16.msra.mxu0 %v877
        %1275 = vmatprep.subr.bf16.mxu0 0
        %1276 = vmatpush1.bf16.msra.mxu0 %v878
        %1277 = vmatprep.subr.bf16.mxu0 0
        %1278 = vmatpush1.bf16.msra.mxu0 %v879
        %1279 = vmatprep.subr.bf16.mxu0 0
        %1280 = vmatpush1.bf16.msra.mxu0 %v880
        %1281 = vmatprep.subr.bf16.mxu0 0
        %1282 = vmatpush1.bf16.msra.mxu0 %v881
        %1283 = vmatprep.subr.bf16.mxu0 0
        %1284 = vmatpush1.bf16.msra.mxu0 %v882
        %1285 = vmatprep.subr.bf16.mxu0 0
        %1286 = vmatpush1.bf16.msra.mxu0 %v883
        %1287 = vmatprep.subr.bf16.mxu0 0
        %1288 = vmatpush1.bf16.msra.mxu0 %v884
        %1289 = vmatprep.subr.bf16.mxu0 0
        %1290 = vmatpush1.bf16.msra.mxu0 %v885
        %1291 = vmatprep.subr.bf16.mxu0 0
        %1292 = vmatpush1.bf16.msra.mxu0 %v886
        %1293 = vmatprep.subr.bf16.mxu0 0
        %1294 = vmatpush1.bf16.msra.mxu0 %v887
        %1295 = vmatprep.subr.bf16.mxu0 0
        %1296 = vmatpush1.bf16.msra.mxu0 %v888
        %1297 = vmatprep.subr.bf16.mxu0 0
        %1298 = vmatpush1.bf16.msra.mxu0 %v889
        %1299 = vmatprep.subr.bf16.mxu0 0
        %1300 = vmatpush1.bf16.msra.mxu0 %v890
        %1301 = vmatprep.subr.bf16.mxu0 0
        %1302 = vmatpush1.bf16.msra.mxu0 %v891
        %1303 = vmatprep.mubr.bf16.mxu0 %v1226
        %1304 = vmatmul.mubr.bf16.gmra.mrb[0].mxu0 %v1222
        %v1305 = vpop.f32.mrb[0].mxu0
        %v1306 = vadd.f32 %v1266, %v1305
        %v1307 = vpop.f32.mrb[0].mxu0
        %v1308 = vpop.f32.mrb[0].mxu0
        %v1309 = vpop.f32.mrb[0].mxu0
        %1310 = vdwg.mxu0
        %1311 = vmatprep.subr.bf16.mxu0 0
        %1312 = vmatpush1.bf16.msra.mxu0 %v892
        %1313 = vmatprep.subr.bf16.mxu0 0
        %1314 = vmatpush1.bf16.msra.mxu0 %v893
        %1315 = vmatprep.subr.bf16.mxu0 0
        %1316 = vmatpush1.bf16.msra.mxu0 %v894
        %1317 = vmatprep.subr.bf16.mxu0 0
        %1318 = vmatpush1.bf16.msra.mxu0 %v895
        %1319 = vmatprep.subr.bf16.mxu0 0
        %1320 = vmatpush1.bf16.msra.mxu0 0
        %1321 = vmatprep.subr.bf16.mxu0 0
        %1322 = vmatpush1.bf16.msra.mxu0 0
        %1323 = vmatprep.subr.bf16.mxu0 0
        %1324 = vmatpush1.bf16.msra.mxu0 0
        %1325 = vmatprep.subr.bf16.mxu0 0
        %1326 = vmatpush1.bf16.msra.mxu0 0
        %1327 = vmatprep.subr.bf16.mxu0 0
        %1328 = vmatpush1.bf16.msra.mxu0 0
        %1329 = vmatprep.subr.bf16.mxu0 0
        %1330 = vmatpush1.bf16.msra.mxu0 0
        %1331 = vmatprep.subr.bf16.mxu0 0
        %1332 = vmatpush1.bf16.msra.mxu0 0
        %1333 = vmatprep.subr.bf16.mxu0 0
        %1334 = vmatpush1.bf16.msra.mxu0 0
        %1335 = vmatprep.subr.bf16.mxu0 0
        %1336 = vmatpush1.bf16.msra.mxu0 0
        %1337 = vmatprep.subr.bf16.mxu0 0
        %1338 = vmatpush1.bf16.msra.mxu0 0
        %1339 = vmatprep.subr.bf16.mxu0 0
        %1340 = vmatpush1.bf16.msra.mxu0 0
        %1341 = vmatprep.subr.bf16.mxu0 0
        %1342 = vmatpush1.bf16.msra.mxu0 0
        %1343 = vmatprep.mubr.bf16.mxu0 0
        %1344 = vmatmul.mubr.bf16.gmra.mrb[0].mxu0 %v1229
        %v1345 = vpop.f32.mrb[0].mxu0
        %v1346 = vadd.f32 %v1306, %v1345
        %v1347 = vpop.f32.mrb[0].mxu0
        %v1348 = vpop.f32.mrb[0].mxu0
        %v1349 = vpop.f32.mrb[0].mxu0
        %1350 = vdwg.mxu0
        %v1351 = vmax.f32 %v1346, 0.0
        %v1352 = vpack.c.bf16 %v1351, %v1351
        %v1353 = vrot.slane %v599, 4
        %1354 = vrot.lane.b32.xlu0 %v1353, 64
        %v1355 = vpop.permute.xlu0 %1354
        %v1356 = vrot.slane %v599, 6
        %v1358 = vrot.slane %v601, 4
        %v1361 = vsel %vm620, %v1062, %v1355
        %v1363 = vsel %vm620, %v1356, %v1211
        %v1367 = vrot.slane %v1361, 4
        %v1368 = vrot.slane %v1363, 4
        %v1369 = vrot.slane %v1226, 4
        %v1370 = vrot.slane %v1358, 4
        %v1375 = vsel %vm620, %v1370, 0
        %1377 = vmatprep.subr.bf16.mxu0 0
        %1378 = vmatpush1.bf16.msra.mxu0 %v860
        %1379 = vmatprep.subr.bf16.mxu0 0
        %1380 = vmatpush1.bf16.msra.mxu0 %v861
        %1381 = vmatprep.subr.bf16.mxu0 0
        %1382 = vmatpush1.bf16.msra.mxu0 %v862
        %1383 = vmatprep.subr.bf16.mxu0 0
        %1384 = vmatpush1.bf16.msra.mxu0 %v863
        %1385 = vmatprep.subr.bf16.mxu0 0
        %1386 = vmatpush1.bf16.msra.mxu0 %v864
        %1387 = vmatprep.subr.bf16.mxu0 0
        %1388 = vmatpush1.bf16.msra.mxu0 %v865
        %1389 = vmatprep.subr.bf16.mxu0 0
        %1390 = vmatpush1.bf16.msra.mxu0 %v866
        %1391 = vmatprep.subr.bf16.mxu0 0
        %1392 = vmatpush1.bf16.msra.mxu0 %v867
        %1393 = vmatprep.subr.bf16.mxu0 0
        %1394 = vmatpush1.bf16.msra.mxu0 %v868
        %1395 = vmatprep.subr.bf16.mxu0 0
        %1396 = vmatpush1.bf16.msra.mxu0 %v869
        %1397 = vmatprep.subr.bf16.mxu0 0
        %1398 = vmatpush1.bf16.msra.mxu0 %v870
        %1399 = vmatprep.subr.bf16.mxu0 0
        %1400 = vmatpush1.bf16.msra.mxu0 %v871
        %1401 = vmatprep.subr.bf16.mxu0 0
        %1402 = vmatpush1.bf16.msra.mxu0 %v872
        %1403 = vmatprep.subr.bf16.mxu0 0
        %1404 = vmatpush1.bf16.msra.mxu0 %v873
        %1405 = vmatprep.subr.bf16.mxu0 0
        %1406 = vmatpush1.bf16.msra.mxu0 %v874
        %1407 = vmatprep.subr.bf16.mxu0 0
        %1408 = vmatpush1.bf16.msra.mxu0 %v875
        %1409 = vmatprep.mubr.bf16.mxu0 %v1367
        %1410 = vmatmul.mubr.bf16.gmra.mrb[0].mxu0 %v1075
        %v1411 = vpop.f32.mrb[0].mxu0
        %v1412 = vadd.f32 %v714, %v1411
        %v1413 = vpop.f32.mrb[0].mxu0
        %v1414 = vpop.f32.mrb[0].mxu0
        %v1415 = vpop.f32.mrb[0].mxu0
        %1416 = vdwg.mxu0
        %1417 = vmatprep.subr.bf16.mxu0 0
        %1418 = vmatpush1.bf16.msra.mxu0 %v876
        %1419 = vmatprep.subr.bf16.mxu0 0
        %1420 = vmatpush1.bf16.msra.mxu0 %v877
        %1421 = vmatprep.subr.bf16.mxu0 0
        %1422 = vmatpush1.bf16.msra.mxu0 %v878
        %1423 = vmatprep.subr.bf16.mxu0 0
        %1424 = vmatpush1.bf16.msra.mxu0 %v879
        %1425 = vmatprep.subr.bf16.mxu0 0
        %1426 = vmatpush1.bf16.msra.mxu0 %v880
        %1427 = vmatprep.subr.bf16.mxu0 0
        %1428 = vmatpush1.bf16.msra.mxu0 %v881
        %1429 = vmatprep.subr.bf16.mxu0 0
        %1430 = vmatpush1.bf16.msra.mxu0 %v882
        %1431 = vmatprep.subr.bf16.mxu0 0
        %1432 = vmatpush1.bf16.msra.mxu0 %v883
        %1433 = vmatprep.subr.bf16.mxu0 0
        %1434 = vmatpush1.bf16.msra.mxu0 %v884
        %1435 = vmatprep.subr.bf16.mxu0 0
        %1436 = vmatpush1.bf16.msra.mxu0 %v885
        %1437 = vmatprep.subr.bf16.mxu0 0
        %1438 = vmatpush1.bf16.msra.mxu0 %v886
        %1439 = vmatprep.subr.bf16.mxu0 0
        %1440 = vmatpush1.bf16.msra.mxu0 %v887
        %1441 = vmatprep.subr.bf16.mxu0 0
        %1442 = vmatpush1.bf16.msra.mxu0 %v888
        %1443 = vmatprep.subr.bf16.mxu0 0
        %1444 = vmatpush1.bf16.msra.mxu0 %v889
        %1445 = vmatprep.subr.bf16.mxu0 0
        %1446 = vmatpush1.bf16.msra.mxu0 %v890
        %1447 = vmatprep.subr.bf16.mxu0 0
        %1448 = vmatpush1.bf16.msra.mxu0 %v891
        %1449 = vmatprep.mubr.bf16.mxu0 %v1369
        %1450 = vmatmul.mubr.bf16.gmra.mrb[0].mxu0 %v1368
        %v1451 = vpop.f32.mrb[0].mxu0
        %v1452 = vadd.f32 %v1412, %v1451
        %v1453 = vpop.f32.mrb[0].mxu0
        %v1454 = vpop.f32.mrb[0].mxu0
        %v1455 = vpop.f32.mrb[0].mxu0
        %1456 = vdwg.mxu0
        %1457 = vmatprep.subr.bf16.mxu0 0
        %1458 = vmatpush1.bf16.msra.mxu0 %v892
        %1459 = vmatprep.subr.bf16.mxu0 0
        %1460 = vmatpush1.bf16.msra.mxu0 %v893
        %1461 = vmatprep.subr.bf16.mxu0 0
        %1462 = vmatpush1.bf16.msra.mxu0 %v894
        %1463 = vmatprep.subr.bf16.mxu0 0
        %1464 = vmatpush1.bf16.msra.mxu0 %v895
        %1465 = vmatprep.subr.bf16.mxu0 0
        %1466 = vmatpush1.bf16.msra.mxu0 0
        %1467 = vmatprep.subr.bf16.mxu0 0
        %1468 = vmatpush1.bf16.msra.mxu0 0
        %1469 = vmatprep.subr.bf16.mxu0 0
        %1470 = vmatpush1.bf16.msra.mxu0 0
        %1471 = vmatprep.subr.bf16.mxu0 0
        %1472 = vmatpush1.bf16.msra.mxu0 0
        %1473 = vmatprep.subr.bf16.mxu0 0
        %1474 = vmatpush1.bf16.msra.mxu0 0
        %1475 = vmatprep.subr.bf16.mxu0 0
        %1476 = vmatpush1.bf16.msra.mxu0 0
        %1477 = vmatprep.subr.bf16.mxu0 0
        %1478 = vmatpush1.bf16.msra.mxu0 0
        %1479 = vmatprep.subr.bf16.mxu0 0
        %1480 = vmatpush1.bf16.msra.mxu0 0
        %1481 = vmatprep.subr.bf16.mxu0 0
        %1482 = vmatpush1.bf16.msra.mxu0 0
        %1483 = vmatprep.subr.bf16.mxu0 0
        %1484 = vmatpush1.bf16.msra.mxu0 0
        %1485 = vmatprep.subr.bf16.mxu0 0
        %1486 = vmatpush1.bf16.msra.mxu0 0
        %1487 = vmatprep.subr.bf16.mxu0 0
        %1488 = vmatpush1.bf16.msra.mxu0 0
        %1489 = vmatprep.mubr.bf16.mxu0 0
        %1490 = vmatmul.mubr.bf16.gmra.mrb[0].mxu0 %v1375
        %v1491 = vpop.f32.mrb[0].mxu0
        %v1492 = vadd.f32 %v1452, %v1491
        %v1493 = vpop.f32.mrb[0].mxu0
        %v1494 = vpop.f32.mrb[0].mxu0
        %v1495 = vpop.f32.mrb[0].mxu0
        %1496 = vdwg.mxu0
        %v1497 = vmax.f32 %v1492, 0.0
        %v1498 = vpack.c.bf16 %v1497, %v1497
        %v1499 = vld [vmem:[%s5] sm:$0xf]
        %v1500 = vld [vmem:[%s5 + $0x4] sm:$0xf]
        %v1501 = vld [vmem:[%s5 + $0x8] sm:$0xf]
        %v1502 = vld [vmem:[%s5 + $0xc] sm:$0xf]
        %v1503 = vld [vmem:[%s5 + $0x10] sm:$0xf]
        %v1504 = vld [vmem:[%s5 + $0x14] sm:$0xf]
        %v1505 = vld [vmem:[%s5 + $0x18] sm:$0xf]
        %v1506 = vld [vmem:[%s5 + $0x1c] sm:$0xf]
        %v1507 = vld [vmem:[%s5 + $0x20] sm:$0xf]
        %v1508 = vld [vmem:[%s5 + $0x24] sm:$0xf]
        %v1509 = vld [vmem:[%s5 + $0x28] sm:$0xf]
        %v1510 = vld [vmem:[%s5 + $0x2c] sm:$0xf]
        %v1511 = vld [vmem:[%s5 + $0x30] sm:$0xf]
        %v1512 = vld [vmem:[%s5 + $0x34] sm:$0xf]
        %v1513 = vld [vmem:[%s5 + $0x38] sm:$0xf]
        %v1514 = vld [vmem:[%s5 + $0x3c] sm:$0xf]
        %v1515 = vld [vmem:[%s5 + $0x40] sm:$0xf]
        %v1516 = vld [vmem:[%s5 + $0x44] sm:$0xf]
        %v1517 = vld [vmem:[%s5 + $0x48] sm:$0xf]
        %v1518 = vld [vmem:[%s5 + $0x4c] sm:$0xf]
        %v1519 = vld [vmem:[%s5 + $0x50] sm:$0xf]
        %v1520 = vld [vmem:[%s5 + $0x54] sm:$0xf]
        %v1521 = vld [vmem:[%s5 + $0x58] sm:$0xf]
        %v1522 = vld [vmem:[%s5 + $0x5c] sm:$0xf]
        %v1523 = vld [vmem:[%s5 + $0x60] sm:$0xf]
        %v1524 = vld [vmem:[%s5 + $0x64] sm:$0xf]
        %v1525 = vld [vmem:[%s5 + $0x68] sm:$0xf]
        %v1526 = vld [vmem:[%s5 + $0x6c] sm:$0xf]
        %v1527 = vld [vmem:[%s5 + $0x70] sm:$0xf]
        %v1528 = vld [vmem:[%s5 + $0x74] sm:$0xf]
        %v1529 = vld [vmem:[%s5 + $0x78] sm:$0xf]
        %v1530 = vld [vmem:[%s5 + $0x7c] sm:$0xf]
        %v1531 = vld [vmem:[%s5 + $0x80] sm:$0xf]
        %v1532 = vld [vmem:[%s5 + $0x84] sm:$0xf]
        %v1533 = vld [vmem:[%s5 + $0x88] sm:$0xf]
        %v1534 = vld [vmem:[%s5 + $0x8c] sm:$0xf]
        %v1535 = vld [vmem:[%s5 + $0x90] sm:$0xf]
        %v1536 = vld [vmem:[%s5 + $0x94] sm:$0xf]
        %v1537 = vld [vmem:[%s5 + $0x98] sm:$0xf]
        %v1538 = vld [vmem:[%s5 + $0x9c] sm:$0xf]
        %v1539 = vld [vmem:[%s5 + $0xa0] sm:$0xf]
        %v1540 = vld [vmem:[%s5 + $0xa4] sm:$0xf]
        %v1541 = vld [vmem:[%s5 + $0xa8] sm:$0xf]
        %v1542 = vld [vmem:[%s5 + $0xac] sm:$0xf]
        %v1543 = vld [vmem:[%s5 + $0xb0] sm:$0xf]
        %v1544 = vld [vmem:[%s5 + $0xb4] sm:$0xf]
        %v1545 = vld [vmem:[%s5 + $0xb8] sm:$0xf]
        %v1546 = vld [vmem:[%s5 + $0xbc] sm:$0xf]
        %v1547 = vld [vmem:[%s5 + $0xc0] sm:$0xf]
        %v1548 = vld [vmem:[%s5 + $0xc4] sm:$0xf]
        %v1549 = vld [vmem:[%s5 + $0xc8] sm:$0xf]
        %v1550 = vld [vmem:[%s5 + $0xcc] sm:$0xf]
        %v1551 = vld [vmem:[%s5 + $0xd0] sm:$0xf]
        %v1552 = vld [vmem:[%s5 + $0xd4] sm:$0xf]
        %v1553 = vld [vmem:[%s5 + $0xd8] sm:$0xf]
        %v1554 = vld [vmem:[%s5 + $0xdc] sm:$0xf]
        %v1555 = vld [vmem:[%s5 + $0xe0] sm:$0xf]
        %v1556 = vld [vmem:[%s5 + $0xe4] sm:$0xf]
        %v1557 = vld [vmem:[%s5 + $0xe8] sm:$0xf]
        %v1558 = vld [vmem:[%s5 + $0xec] sm:$0xf]
        %v1559 = vld [vmem:[%s5 + $0xf0] sm:$0xf]
        %v1560 = vld [vmem:[%s5 + $0xf4] sm:$0xf]
        %v1561 = vld [vmem:[%s5 + $0xf8] sm:$0xf]
        %v1562 = vld [vmem:[%s5 + $0xfc] sm:$0xf]
        %v1563 = vld [vmem:[%s6] sm:$0x1]
        %v1565 = vlaneseq
        %v1566 = vshrl.u32 %v1565, 7
        %v1567 = vsub.s32 0, %v1566
        %v1568 = vrot.slane %v1563, %v1567
        %v1634 = vunpack.c.l.b16 %v1499
        %v1635 = vunpack.c.l.b16 %v1500
        %v1636 = vunpack.c.l.b16 %v1501
        %v1637 = vunpack.c.l.b16 %v1502
        %v1638 = vunpack.c.l.b16 %v1503
        %v1639 = vunpack.c.l.b16 %v1504
        %v1640 = vunpack.c.l.b16 %v1505
        %v1641 = vunpack.c.l.b16 %v1506
        %v1642 = vunpack.c.l.b16 %v1507
        %v1643 = vunpack.c.l.b16 %v1508
        %v1644 = vunpack.c.l.b16 %v1509
        %v1645 = vunpack.c.l.b16 %v1510
        %v1646 = vunpack.c.l.b16 %v1511
        %v1647 = vunpack.c.l.b16 %v1512
        %v1648 = vunpack.c.l.b16 %v1513
        %v1649 = vunpack.c.l.b16 %v1514
        %v1650 = vunpack.c.l.b16 %v1515
        %v1651 = vunpack.c.l.b16 %v1516
        %v1652 = vunpack.c.l.b16 %v1517
        %v1653 = vunpack.c.l.b16 %v1518
        %v1654 = vunpack.c.l.b16 %v1519
        %v1655 = vunpack.c.l.b16 %v1520
        %v1656 = vunpack.c.l.b16 %v1521
        %v1657 = vunpack.c.l.b16 %v1522
        %v1658 = vunpack.c.l.b16 %v1523
        %v1659 = vunpack.c.l.b16 %v1524
        %v1660 = vunpack.c.l.b16 %v1525
        %v1661 = vunpack.c.l.b16 %v1526
        %v1662 = vunpack.c.l.b16 %v1527
        %v1663 = vunpack.c.l.b16 %v1528
        %v1664 = vunpack.c.l.b16 %v1529
        %v1665 = vunpack.c.l.b16 %v1530
        %v1666 = vunpack.c.l.b16 %v1531
        %v1667 = vunpack.c.l.b16 %v1532
        %v1668 = vunpack.c.l.b16 %v1533
        %v1669 = vunpack.c.l.b16 %v1534
        %v1670 = vunpack.c.l.b16 %v1535
        %v1671 = vunpack.c.l.b16 %v1536
        %v1672 = vunpack.c.l.b16 %v1537
        %v1673 = vunpack.c.l.b16 %v1538
        %v1674 = vunpack.c.l.b16 %v1539
        %v1675 = vunpack.c.l.b16 %v1540
        %v1676 = vunpack.c.l.b16 %v1541
        %v1677 = vunpack.c.l.b16 %v1542
        %v1678 = vunpack.c.l.b16 %v1543
        %v1679 = vunpack.c.l.b16 %v1544
        %v1680 = vunpack.c.l.b16 %v1545
        %v1681 = vunpack.c.l.b16 %v1546
        %v1682 = vunpack.c.l.b16 %v1547
        %v1683 = vunpack.c.l.b16 %v1548
        %v1684 = vunpack.c.l.b16 %v1549
        %v1685 = vunpack.c.l.b16 %v1550
        %v1686 = vunpack.c.l.b16 %v1551
        %v1687 = vunpack.c.l.b16 %v1552
        %v1688 = vunpack.c.l.b16 %v1553
        %v1689 = vunpack.c.l.b16 %v1554
        %v1690 = vunpack.c.l.b16 %v1555
        %v1691 = vunpack.c.l.b16 %v1556
        %v1692 = vunpack.c.l.b16 %v1557
        %v1693 = vunpack.c.l.b16 %v1558
        %v1694 = vunpack.c.l.b16 %v1559
        %v1695 = vunpack.c.l.b16 %v1560
        %v1696 = vunpack.c.l.b16 %v1561
        %v1697 = vunpack.c.l.b16 %v1562
        %v1698 = vpack.c.b16 %v1635, %v1634
        %v1699 = vpack.c.b16 %v1637, %v1636
        %v1700 = vpack.c.b16 %v1639, %v1638
        %v1701 = vpack.c.b16 %v1641, %v1640
        %v1702 = vpack.c.b16 %v1643, %v1642
        %v1703 = vpack.c.b16 %v1645, %v1644
        %v1704 = vpack.c.b16 %v1647, %v1646
        %v1705 = vpack.c.b16 %v1649, %v1648
        %v1706 = vpack.c.b16 %v1651, %v1650
        %v1707 = vpack.c.b16 %v1653, %v1652
        %v1708 = vpack.c.b16 %v1655, %v1654
        %v1709 = vpack.c.b16 %v1657, %v1656
        %v1710 = vpack.c.b16 %v1659, %v1658
        %v1711 = vpack.c.b16 %v1661, %v1660
        %v1712 = vpack.c.b16 %v1663, %v1662
        %v1713 = vpack.c.b16 %v1665, %v1664
        %v1714 = vpack.c.b16 %v1667, %v1666
        %v1715 = vpack.c.b16 %v1669, %v1668
        %v1716 = vpack.c.b16 %v1671, %v1670
        %v1717 = vpack.c.b16 %v1673, %v1672
        %v1718 = vpack.c.b16 %v1675, %v1674
        %v1719 = vpack.c.b16 %v1677, %v1676
        %v1720 = vpack.c.b16 %v1679, %v1678
        %v1721 = vpack.c.b16 %v1681, %v1680
        %v1722 = vpack.c.b16 %v1683, %v1682
        %v1723 = vpack.c.b16 %v1685, %v1684
        %v1724 = vpack.c.b16 %v1687, %v1686
        %v1725 = vpack.c.b16 %v1689, %v1688
        %v1726 = vpack.c.b16 %v1691, %v1690
        %v1727 = vpack.c.b16 %v1693, %v1692
        %v1728 = vpack.c.b16 %v1695, %v1694
        %v1729 = vpack.c.b16 %v1697, %v1696
        %1762 = vmatprep.subr.bf16.mxu0 0
        %1763 = vmatpush1.bf16.msra.mxu0 %v1698
        %1764 = vmatprep.subr.bf16.mxu0 0
        %1765 = vmatpush1.bf16.msra.mxu0 %v1699
        %1766 = vmatprep.subr.bf16.mxu0 0
        %1767 = vmatpush1.bf16.msra.mxu0 %v1700
        %1768 = vmatprep.subr.bf16.mxu0 0
        %1769 = vmatpush1.bf16.msra.mxu0 %v1701
        %1770 = vmatprep.subr.bf16.mxu0 0
        %1771 = vmatpush1.bf16.msra.mxu0 %v1702
        %1772 = vmatprep.subr.bf16.mxu0 0
        %1773 = vmatpush1.bf16.msra.mxu0 %v1703
        %1774 = vmatprep.subr.bf16.mxu0 0
        %1775 = vmatpush1.bf16.msra.mxu0 %v1704
        %1776 = vmatprep.subr.bf16.mxu0 0
        %1777 = vmatpush1.bf16.msra.mxu0 %v1705
        %1778 = vmatprep.subr.bf16.mxu0 0
        %1779 = vmatpush1.bf16.msra.mxu0 %v1706
        %1780 = vmatprep.subr.bf16.mxu0 0
        %1781 = vmatpush1.bf16.msra.mxu0 %v1707
        %1782 = vmatprep.subr.bf16.mxu0 0
        %1783 = vmatpush1.bf16.msra.mxu0 %v1708
        %1784 = vmatprep.subr.bf16.mxu0 0
        %1785 = vmatpush1.bf16.msra.mxu0 %v1709
        %1786 = vmatprep.subr.bf16.mxu0 0
        %1787 = vmatpush1.bf16.msra.mxu0 %v1710
        %1788 = vmatprep.subr.bf16.mxu0 0
        %1789 = vmatpush1.bf16.msra.mxu0 %v1711
        %1790 = vmatprep.subr.bf16.mxu0 0
        %1791 = vmatpush1.bf16.msra.mxu0 %v1712
        %1792 = vmatprep.subr.bf16.mxu0 0
        %1793 = vmatpush1.bf16.msra.mxu0 %v1713
        %1794 = vmatprep.mubr.bf16.mxu0 %v1205
        %1795 = vmatmul.mubr.bf16.gmra.mrb[0].mxu0 %v1056
        %v1796 = vpop.f32.mrb[0].mxu0
        %v1797 = vadd.f32 %v1568, %v1796
        %v1798 = vpop.f32.mrb[0].mxu0
        %v1799 = vpop.f32.mrb[0].mxu0
        %v1800 = vpop.f32.mrb[0].mxu0
        %1801 = vdwg.mxu0
        %1802 = vmatprep.subr.bf16.mxu0 0
        %1803 = vmatpush1.bf16.msra.mxu0 %v1714
        %1804 = vmatprep.subr.bf16.mxu0 0
        %1805 = vmatpush1.bf16.msra.mxu0 %v1715
        %1806 = vmatprep.subr.bf16.mxu0 0
        %1807 = vmatpush1.bf16.msra.mxu0 %v1716
        %1808 = vmatprep.subr.bf16.mxu0 0
        %1809 = vmatpush1.bf16.msra.mxu0 %v1717
        %1810 = vmatprep.subr.bf16.mxu0 0
        %1811 = vmatpush1.bf16.msra.mxu0 %v1718
        %1812 = vmatprep.subr.bf16.mxu0 0
        %1813 = vmatpush1.bf16.msra.mxu0 %v1719
        %1814 = vmatprep.subr.bf16.mxu0 0
        %1815 = vmatpush1.bf16.msra.mxu0 %v1720
        %1816 = vmatprep.subr.bf16.mxu0 0
        %1817 = vmatpush1.bf16.msra.mxu0 %v1721
        %1818 = vmatprep.subr.bf16.mxu0 0
        %1819 = vmatpush1.bf16.msra.mxu0 %v1722
        %1820 = vmatprep.subr.bf16.mxu0 0
        %1821 = vmatpush1.bf16.msra.mxu0 %v1723
        %1822 = vmatprep.subr.bf16.mxu0 0
        %1823 = vmatpush1.bf16.msra.mxu0 %v1724
        %1824 = vmatprep.subr.bf16.mxu0 0
        %1825 = vmatpush1.bf16.msra.mxu0 %v1725
        %1826 = vmatprep.subr.bf16.mxu0 0
        %1827 = vmatpush1.bf16.msra.mxu0 %v1726
        %1828 = vmatprep.subr.bf16.mxu0 0
        %1829 = vmatpush1.bf16.msra.mxu0 %v1727
        %1830 = vmatprep.subr.bf16.mxu0 0
        %1831 = vmatpush1.bf16.msra.mxu0 %v1728
        %1832 = vmatprep.subr.bf16.mxu0 0
        %1833 = vmatpush1.bf16.msra.mxu0 %v1729
        %1834 = vmatprep.mubr.bf16.mxu0 %v1498
        %1835 = vmatmul.mubr.bf16.gmra.mrb[0].mxu0 %v1352
        %v1836 = vpop.f32.mrb[0].mxu0
        %v1837 = vadd.f32 %v1797, %v1836
        %v1838 = vpop.f32.mrb[0].mxu0
        %v1839 = vpop.f32.mrb[0].mxu0
        %v1840 = vpop.f32.mrb[0].mxu0
        %1841 = vdwg.mxu0
        %v1842 = vlaneseq
        %v1843 = vand.u32 %v1842, 127
        %vm1844 = vcmp.lt.s32.totalorder %v1843, 50
        %v1845 = vsel %vm1844, 1, 0
        %v1846 = vcvt.s32.f32 %v1845
        %v1847 = vmul.f32 %v1837, %v1846
        %vm1848 = vcmask 1043456
        %v1849 = vsel %vm1848, %v1847, 0.0
        %1850 = vadd.xlane.f32.xlu0 %v1849
        %v1851 = vpop.xlane.xlu0 %1850
        %v1852 = vmul.f32 %v1851, 0.02
        %v1853 = vsub.f32 %v1837, %v1852
        %v1854 = vmul.f32 %v1853, %v1846
        %v1855 = vmul.f32 %v1854, %v1854
        %v1856 = vsel %vm1848, %v1855, 0.0
        %1857 = vadd.xlane.f32.xlu0 %v1856
        %v1858 = vpop.xlane.xlu0 %1857
        %v1859 = vmul.f32 %v1858, 0.02
        %v1860 = vadd.f32 %v1859, 1e-05
        %v1861 = vrsqrt.pop %v1860
        %v1862 = vmul.f32 %v1854, %v1861
        %v1863 = vld [vmem:[%s7] sm:$0x1]
        %v1865 = vlaneseq
        %v1866 = vshrl.u32 %v1865, 7
        %v1867 = vsub.s32 0, %v1866
        %v1868 = vrot.slane %v1863, %v1867
        %v1870 = vmul.f32 %v1862, %v1868
        %v1871 = vld [vmem:[%s8] sm:$0x1]
        %v1873 = vlaneseq
        %v1874 = vshrl.u32 %v1873, 7
        %v1875 = vsub.s32 0, %v1874
        %v1876 = vrot.slane %v1871, %v1875
        %v1878 = vadd.f32 %v1870, %v1876
        %v1879 = vtanh.pop %v1878
        %1880 = vst [vmem:[%s325] sm:$0xf] %v1879
        %s1881 = sand.u32 %s225, 1
        %s1882 = scalar_lea.sflag [#allocation3], %s1881
        %s1883 = sand.u32 %s225, 1
        %s1884 = smul.addr %s1883, 4
        %s1885 = scalar_lea.vmem [#allocation2], %s1884
        // Predicated region
        $region57: #{carla_encoder_forward.1} parent=55 // pred_check
          %p1886 = pneg %p235
        $region58: #{carla_encoder_forward.1} parent=55 // pred_check_branch
          %1888 = sbr.rel (%p1886) target = $region60
        $region59: #{carla_encoder_forward.1} parent=55 // pred_region
          %s1890 = ssub.s32 64, 64
          %1891 = vsyncadd %s1882, %s1890
          %s1892 = smul.addr %s23, 64
          %s1893 = scalar_lea.hbm %s9, %s1892
          %s1895 = sshll.u32 %s1885, 4
          %s1896 = int_to_ptr.vmem [resolvable:$true] %s1895
          %1898 = dma.vmem_to_hbm [thread:$0]  %s1896, 64, %s1893, %s1882
        $region60: #{carla_encoder_forward.1} parent=55 // pred_fallthru
          _
      $region56: #{carla_encoder_forward.1} parent=5 // pred_fallthru
        _
      %p1899 = scmp.le.s32.totalorder 2, %s18
      // Predicated region
      $region61: #{carla_encoder_forward.1} parent=5 // pred_check
        %p1900 = pneg %p1899
      $region62: #{carla_encoder_forward.1} parent=5 // pred_check_branch
        %1902 = sbr.rel (%p1900) target = $region64
      $region63: #{carla_encoder_forward.1} parent=5 // pred_region
        %s1903 = ssub.s32 %s18, 2
        // Predicated region
        $region65: #{carla_encoder_forward.1} parent=63 // pred_check
          %p1904 = pneg %p241
        $region66: #{carla_encoder_forward.1} parent=63 // pred_check_branch
          %1906 = sbr.rel (%p1904) target = $region68
        $region67: #{carla_encoder_forward.1} parent=63 // pred_region
          %s1907 = sand.u32 %s226, 1
          %s1908 = scalar_lea.sflag [#allocation3], %s1907
          %s1909 = sand.u32 %s226, 1
          %s1910 = smul.addr %s1909, 4
          %s1911 = scalar_lea.vmem [#allocation2], %s1910
          %1912 = dma.done %s1908, 64
        $region68: #{carla_encoder_forward.1} parent=63 // pred_fallthru
          _
      $region64: #{carla_encoder_forward.1} parent=5 // pred_fallthru
        _
    $region6: #{carla_encoder_forward.1} parent=1 // loop_footer
      %s22 = sadd.s32 1, %s18
    $region7: #{carla_encoder_forward.1} parent=1 // loop_footer_branch
      %17 = sbr.rel target = $region3
    $region8: #{carla_encoder_forward.1} parent=1 // loop_exit
      _
    %1913 = vsyncpa [#allocation3], 1
    %s1914 = scalar_lea.sflag [#allocation3], 1
    %1915 = vsyncpa %s1914, 1

</llo_original>
